<compile_context>
chip_gen: v6e
topology: v6e:2x2x1
jax: 0.10.0
libtpu: 0.0.40
codegen_flags: <defaults>
</compile_context>

<pallas_src>
import jax
import jax.numpy as jnp
from jax.experimental import pallas as pl
from jax.experimental.pallas import tpu as pltpu


# ----------------------------------------------------------------------------- helpers
def _full_spec(shape):
    # Whole-array block (no grid), resident in VMEM.
    return pl.BlockSpec(shape, lambda: (0,) * len(shape))


# ----------------------------------------------------------------------------- fused kernel
def _bgrl_fused_kernel(
    alphas_ref,                      # SMEM (3,): enc_alpha, pred_alpha1, pred_alpha2
    a_ref,                           # [N, N]        A_hat
    x_ref,                           # [N, 2*IN]     x1 | x2 (lane-concat of the two views)
    w1_ref, b1_ref,                  # [IN, HID],    [1, 2*HID]   (bias pre-tiled per view)
    w2_ref, b2_ref,                  # [HID, OUT],   [1, 2*OUT]
    pw1_ref, pb1_ref, g1_ref, be1_ref,   # [OUT, PRED], [1, 2*PRED] x3
    pw2_ref, pb2_ref, g2_ref, be2_ref,   # [PRED, OUT], [1, 2*OUT]  x3
    o_ref,                           # [N, 4*OUT]    z1 | z2 | p1 | p2
):
    eps = 1e-5

    def prelu(v, a):
        return jnp.where(v > 0, v, a * v)

    def two_view_matmul(v_cat, w_ref):
        # v_cat = [view1 | view2] along lanes; both views share the same weight.
        d = w_ref.shape[0]
        w = w_ref[...]
        return jnp.concatenate(
            [
                jnp.dot(v_cat[:, :d], w, preferred_element_type=jnp.float32),
                jnp.dot(v_cat[:, d:], w, preferred_element_type=jnp.float32),
            ],
            axis=1,
        )

    def batchnorm(v, g, b):
        # Training-mode BatchNorm1d: biased batch statistics over the node axis.
        mu = jnp.mean(v, axis=0, keepdims=True)
        var = jnp.mean((v - mu) * (v - mu), axis=0, keepdims=True)
        return (v - mu) * jax.lax.rsqrt(var + eps) * g + b

    a_hat = a_ref[...]               # loaded once, reused by both GCN layers

    # ---- GCN layer 1: (A_hat @ X) @ W1 + b1 -> PReLU ------------------------------------
    ax = jnp.dot(a_hat, x_ref[...], preferred_element_type=jnp.float32)      # [N, 2*IN]
    h = prelu(two_view_matmul(ax, w1_ref) + b1_ref[...], alphas_ref[0])       # [N, 2*HID]

    # ---- GCN layer 2: (A_hat @ H) @ W2 + b2 (no activation) -----------------------------
    ah = jnp.dot(a_hat, h, preferred_element_type=jnp.float32)               # [N, 2*HID]
    z = two_view_matmul(ah, w2_ref) + b2_ref[...]                            # [N, 2*OUT] = z1|z2

    # ---- Predictor: Linear -> BN -> PReLU -> Linear -> BN -> PReLU ----------------------
    # BN stats are per column, so the lane-concatenated layout reproduces the per-view
    # batch statistics of two separate predictor(h) calls exactly.
    p = two_view_matmul(z, pw1_ref) + pb1_ref[...]                           # [N, 2*PRED]
    p = prelu(batchnorm(p, g1_ref[...], be1_ref[...]), alphas_ref[1])
    q = two_view_matmul(p, pw2_ref) + pb2_ref[...]                           # [N, 2*OUT]
    q = prelu(batchnorm(q, g2_ref[...], be2_ref[...]), alphas_ref[2])

    # Lane-dense output slab [N, 4*OUT] = [z1 | z2 | p1 | p2]
    o_ref[...] = jnp.concatenate([z, q], axis=1).astype(o_ref.dtype)


# ----------------------------------------------------------------------------- model glue
def normalized_adjacency(n):
    """Deterministic ring graph + self loops, D^-1/2 (A+I) D^-1/2."""
    idx = jnp.arange(n)
    a = jnp.zeros((n, n), jnp.float32)
    a = a.at[idx, (idx + 1) % n].set(1.0)
    a = a.at[(idx + 1) % n, idx].set(1.0)
    a = a + jnp.eye(n, dtype=jnp.float32)
    deg = jnp.sum(a, axis=1)
    d_inv_sqrt = 1.0 / jnp.sqrt(deg)
    return a * d_inv_sqrt[:, None] * d_inv_sqrt[None, :]


def init_params(key, in_dim, hidden, out_dim, pred_dim):
    ks = jax.random.split(key, 6)
    scale = 0.1
    enc = dict(
        w1=scale * jax.random.normal(ks[0], (in_dim, hidden), jnp.float32),
        b1=jnp.zeros((1, hidden), jnp.float32),
        alpha=jnp.full((1,), 0.25, jnp.float32),          # nn.PReLU() default
        w2=scale * jax.random.normal(ks[1], (hidden, out_dim), jnp.float32),
        b2=jnp.zeros((1, out_dim), jnp.float32),
    )
    pred = dict(
        w1=scale * jax.random.normal(ks[2], (out_dim, pred_dim), jnp.float32),
        b1=jnp.zeros((1, pred_dim), jnp.float32),
        g1=jnp.ones((1, pred_dim), jnp.float32),          # bn1 gamma
        be1=jnp.zeros((1, pred_dim), jnp.float32),        # bn1 beta
        alpha1=jnp.full((1,), 0.25, jnp.float32),         # prelu1
        w2=scale * jax.random.normal(ks[3], (pred_dim, out_dim), jnp.float32),
        b2=jnp.zeros((1, out_dim), jnp.float32),
        g2=jnp.ones((1, out_dim), jnp.float32),           # bn2 gamma
        be2=jnp.zeros((1, out_dim), jnp.float32),         # bn2 beta
        alpha2=jnp.full((1,), 0.25, jnp.float32),         # prelu2
    )
    return enc, pred, ks[4], ks[5]


def bgrl_forward(x, a_hat, enc, pred, key1, key2):
    n, in_dim = x.shape
    out_dim = enc["w2"].shape[1]

    # Augmentor: deterministic feature-column masking for the two views.
    m1 = jax.random.bernoulli(key1, 0.8, (1, in_dim)).astype(x.dtype)
    m2 = jax.random.bernoulli(key2, 0.8, (1, in_dim)).astype(x.dtype)
    x_cat = jnp.concatenate([x * m1, x * m2], axis=1)                 # [N, 2*IN]

    # Per-view broadcast rows, tiled once here (hoisted out of the kernel).
    def t2(v):
        return jnp.tile(v, (1, 2))

    alphas = jnp.concatenate(
        [enc["alpha"], pred["alpha1"], pred["alpha2"]]
    ).astype(jnp.float32)                                             # (3,) SMEM scalars

    args = (
        alphas,
        a_hat, x_cat,
        enc["w1"], t2(enc["b1"]),
        enc["w2"], t2(enc["b2"]),
        pred["w1"], t2(pred["b1"]), t2(pred["g1"]), t2(pred["be1"]),
        pred["w2"], t2(pred["b2"]), t2(pred["g2"]), t2(pred["be2"]),
    )
    in_specs = [pl.BlockSpec(memory_space=pltpu.MemorySpace.SMEM)] + [
        _full_spec(a.shape) for a in args[1:]
    ]

    out = pl.pallas_call(
        _bgrl_fused_kernel,
        out_shape=jax.ShapeDtypeStruct((n, 4 * out_dim), jnp.float32),
        in_specs=in_specs,
        out_specs=_full_spec((n, 4 * out_dim)),
    )(*args)

    h1 = out[:, :out_dim]
    h2 = out[:, out_dim:2 * out_dim]
    h1_pred = out[:, 2 * out_dim:3 * out_dim]
    h2_pred = out[:, 3 * out_dim:]

    # Target encoder is a parameter-identical deepcopy evaluated under no_grad, so its
    # outputs equal stop_gradient(h1/h2); the duplicate encoder passes are elided.
    # (If the target were EMA-updated to different params, this shortcut would not hold.)
    h1_target = jax.lax.stop_gradient(h1)
    h2_target = jax.lax.stop_gradient(h2)
    return h1, h2, h1_pred, h2_pred, h1_target, h2_target


# ----------------------------------------------------------------------------- main
if __name__ == "__main__":
    N = 32          # nodes
    IN_DIM = 16     # input node features
    HIDDEN = 32     # encoder hidden width
    OUT_DIM = 32    # encoder output / BGRL out_dim  (4*OUT_DIM = 128 lane-dense output)
    PRED_DIM = 16   # predictor hidden / BGRL pred_dim

    key = jax.random.PRNGKey(0)
    kx, kp = jax.random.split(key)

    x = jax.random.normal(kx, (N, IN_DIM), jnp.float32)
    a_hat = normalized_adjacency(N)
    enc, pred, kaug1, kaug2 = init_params(kp, IN_DIM, HIDDEN, OUT_DIM, PRED_DIM)

    fwd = jax.jit(bgrl_forward)
    outs = fwd(x, a_hat, enc, pred, kaug1, kaug2)
    outs = jax.block_until_ready(outs)

    h1, h2, h1_pred, h2_pred, h1_target, h2_target = outs
    assert h1.shape == (N, OUT_DIM)
    assert h2.shape == (N, OUT_DIM)
    assert h1_pred.shape == (N, OUT_DIM)
    assert h2_pred.shape == (N, OUT_DIM)
    assert h1_target.shape == (N, OUT_DIM)
    assert h2_target.shape == (N, OUT_DIM)
    assert all(bool(jnp.all(jnp.isfinite(o))) for o in outs)
    assert bool(jnp.allclose(h1_target, h1)) and bool(jnp.allclose(h2_target, h2))

    print("KERNEL_OK")
</pallas_src>

<mosaic_0001>
module attributes {stable_mosaic.version = 11 : i64} {
  func.func @_bgrl_fused_kernel(%arg0: memref<3xf32, #tpu.memory_space<smem>>, %arg1: memref<32x32xf32, #tpu.memory_space<vmem>>, %arg2: memref<32x32xf32, #tpu.memory_space<vmem>>, %arg3: memref<16x32xf32, #tpu.memory_space<vmem>>, %arg4: memref<1x64xf32, #tpu.memory_space<vmem>>, %arg5: memref<32x32xf32, #tpu.memory_space<vmem>>, %arg6: memref<1x64xf32, #tpu.memory_space<vmem>>, %arg7: memref<32x16xf32, #tpu.memory_space<vmem>>, %arg8: memref<1x32xf32, #tpu.memory_space<vmem>>, %arg9: memref<1x32xf32, #tpu.memory_space<vmem>>, %arg10: memref<1x32xf32, #tpu.memory_space<vmem>>, %arg11: memref<16x32xf32, #tpu.memory_space<vmem>>, %arg12: memref<1x64xf32, #tpu.memory_space<vmem>>, %arg13: memref<1x64xf32, #tpu.memory_space<vmem>>, %arg14: memref<1x64xf32, #tpu.memory_space<vmem>>, %arg15: memref<32x128xf32, #tpu.memory_space<vmem>>) attributes {dimension_semantics = [], scalar_prefetch = 0 : i64, scratch_operands = 0 : i64, tpu.core_type = #tpu.core_type<tc>} {
    %c0 = arith.constant 0 : index
    %c0_0 = arith.constant 0 : index
    %0 = vector.load %arg1[%c0, %c0_0] : memref<32x32xf32, #tpu.memory_space<vmem>>, vector<32x32xf32>
    %c0_1 = arith.constant 0 : index
    %c0_2 = arith.constant 0 : index
    %1 = vector.load %arg2[%c0_1, %c0_2] : memref<32x32xf32, #tpu.memory_space<vmem>>, vector<32x32xf32>
    %cst = arith.constant dense<0.000000e+00> : vector<32x32xf32>
    %2 = tpu.matmul %0, %1, %cst {dimension_numbers = #tpu.dot_dimension_numbers<[1], [0], [0], [1], [0, 0, 1, 1], [], []>} : vector<32x32xf32>, vector<32x32xf32>, vector<32x32xf32> -> vector<32x32xf32>
    %c0_3 = arith.constant 0 : index
    %c0_4 = arith.constant 0 : index
    %3 = vector.load %arg3[%c0_3, %c0_4] : memref<16x32xf32, #tpu.memory_space<vmem>>, vector<16x32xf32>
    %4 = vector.extract_strided_slice %2 {offsets = [0, 0], sizes = [32, 16], strides = [1, 1]} : vector<32x32xf32> to vector<32x16xf32>
    %cst_5 = arith.constant dense<0.000000e+00> : vector<32x32xf32>
    %5 = tpu.matmul %4, %3, %cst_5 {dimension_numbers = #tpu.dot_dimension_numbers<[1], [0], [0], [1], [0, 0, 1, 1], [], []>} : vector<32x16xf32>, vector<16x32xf32>, vector<32x32xf32> -> vector<32x32xf32>
    %6 = vector.extract_strided_slice %2 {offsets = [0, 16], sizes = [32, 16], strides = [1, 1]} : vector<32x32xf32> to vector<32x16xf32>
    %cst_6 = arith.constant dense<0.000000e+00> : vector<32x32xf32>
    %7 = tpu.matmul %6, %3, %cst_6 {dimension_numbers = #tpu.dot_dimension_numbers<[1], [0], [0], [1], [0, 0, 1, 1], [], []>} : vector<32x16xf32>, vector<16x32xf32>, vector<32x32xf32> -> vector<32x32xf32>
    %8 = tpu.concatenate %5, %7 in 1 : vector<32x32xf32>, vector<32x32xf32> -> vector<32x64xf32>
    %c0_7 = arith.constant 0 : index
    %c0_8 = arith.constant 0 : index
    %9 = vector.load %arg4[%c0_7, %c0_8] : memref<1x64xf32, #tpu.memory_space<vmem>>, vector<1x64xf32>
    %10 = vector.broadcast %9 : vector<1x64xf32> to vector<32x64xf32>
    %11 = arith.addf %8, %10 : vector<32x64xf32>
    %c0_9 = arith.constant 0 : index
    %12 = memref.load %arg0[%c0_9] : memref<3xf32, #tpu.memory_space<smem>>
    %cst_10 = arith.constant 0.000000e+00 : f32
    %13 = vector.broadcast %cst_10 : f32 to vector<32x64xf32>
    %14 = arith.cmpf ogt, %11, %13 : vector<32x64xf32>
    %15 = vector.broadcast %12 : f32 to vector<32x64xf32>
    %16 = arith.mulf %15, %11 : vector<32x64xf32>
    %17 = arith.select %14, %11, %16 : vector<32x64xi1>, vector<32x64xf32>
    %cst_11 = arith.constant dense<0.000000e+00> : vector<32x64xf32>
    %18 = tpu.matmul %0, %17, %cst_11 {dimension_numbers = #tpu.dot_dimension_numbers<[1], [0], [0], [1], [0, 0, 1, 1], [], []>} : vector<32x32xf32>, vector<32x64xf32>, vector<32x64xf32> -> vector<32x64xf32>
    %c0_12 = arith.constant 0 : index
    %c0_13 = arith.constant 0 : index
    %19 = vector.load %arg5[%c0_12, %c0_13] : memref<32x32xf32, #tpu.memory_space<vmem>>, vector<32x32xf32>
    %20 = vector.extract_strided_slice %18 {offsets = [0, 0], sizes = [32, 32], strides = [1, 1]} : vector<32x64xf32> to vector<32x32xf32>
    %cst_14 = arith.constant dense<0.000000e+00> : vector<32x32xf32>
    %21 = tpu.matmul %20, %19, %cst_14 {dimension_numbers = #tpu.dot_dimension_numbers<[1], [0], [0], [1], [0, 0, 1, 1], [], []>} : vector<32x32xf32>, vector<32x32xf32>, vector<32x32xf32> -> vector<32x32xf32>
    %22 = vector.extract_strided_slice %18 {offsets = [0, 32], sizes = [32, 32], strides = [1, 1]} : vector<32x64xf32> to vector<32x32xf32>
    %cst_15 = arith.constant dense<0.000000e+00> : vector<32x32xf32>
    %23 = tpu.matmul %22, %19, %cst_15 {dimension_numbers = #tpu.dot_dimension_numbers<[1], [0], [0], [1], [0, 0, 1, 1], [], []>} : vector<32x32xf32>, vector<32x32xf32>, vector<32x32xf32> -> vector<32x32xf32>
    %24 = tpu.concatenate %21, %23 in 1 : vector<32x32xf32>, vector<32x32xf32> -> vector<32x64xf32>
    %c0_16 = arith.constant 0 : index
    %c0_17 = arith.constant 0 : index
    %25 = vector.load %arg6[%c0_16, %c0_17] : memref<1x64xf32, #tpu.memory_space<vmem>>, vector<1x64xf32>
    %26 = vector.broadcast %25 : vector<1x64xf32> to vector<32x64xf32>
    %27 = arith.addf %24, %26 : vector<32x64xf32>
    %c0_18 = arith.constant 0 : index
    %c0_19 = arith.constant 0 : index
    %28 = vector.load %arg7[%c0_18, %c0_19] : memref<32x16xf32, #tpu.memory_space<vmem>>, vector<32x16xf32>
    %29 = vector.extract_strided_slice %27 {offsets = [0, 0], sizes = [32, 32], strides = [1, 1]} : vector<32x64xf32> to vector<32x32xf32>
    %cst_20 = arith.constant dense<0.000000e+00> : vector<32x16xf32>
    %30 = tpu.matmul %29, %28, %cst_20 {dimension_numbers = #tpu.dot_dimension_numbers<[1], [0], [0], [1], [0, 0, 1, 1], [], []>} : vector<32x32xf32>, vector<32x16xf32>, vector<32x16xf32> -> vector<32x16xf32>
    %31 = vector.extract_strided_slice %27 {offsets = [0, 32], sizes = [32, 32], strides = [1, 1]} : vector<32x64xf32> to vector<32x32xf32>
    %cst_21 = arith.constant dense<0.000000e+00> : vector<32x16xf32>
    %32 = tpu.matmul %31, %28, %cst_21 {dimension_numbers = #tpu.dot_dimension_numbers<[1], [0], [0], [1], [0, 0, 1, 1], [], []>} : vector<32x32xf32>, vector<32x16xf32>, vector<32x16xf32> -> vector<32x16xf32>
    %33 = tpu.concatenate %30, %32 in 1 : vector<32x16xf32>, vector<32x16xf32> -> vector<32x32xf32>
    %c0_22 = arith.constant 0 : index
    %c0_23 = arith.constant 0 : index
    %34 = vector.load %arg8[%c0_22, %c0_23] : memref<1x32xf32, #tpu.memory_space<vmem>>, vector<1x32xf32>
    %35 = vector.broadcast %34 : vector<1x32xf32> to vector<32x32xf32>
    %36 = arith.addf %33, %35 : vector<32x32xf32>
    %c0_24 = arith.constant 0 : index
    %c0_25 = arith.constant 0 : index
    %37 = vector.load %arg9[%c0_24, %c0_25] : memref<1x32xf32, #tpu.memory_space<vmem>>, vector<1x32xf32>
    %c0_26 = arith.constant 0 : index
    %c0_27 = arith.constant 0 : index
    %38 = vector.load %arg10[%c0_26, %c0_27] : memref<1x32xf32, #tpu.memory_space<vmem>>, vector<1x32xf32>
    %cst_28 = arith.constant dense<0.000000e+00> : vector<32xf32>
    %39 = vector.multi_reduction <add>, %36, %cst_28 [0] : vector<32x32xf32> to vector<32xf32>
    %40 = vector.shape_cast %39 : vector<32xf32> to vector<1x32xf32>
    %cst_29 = arith.constant 3.200000e+01 : f32
    %41 = vector.broadcast %cst_29 : f32 to vector<1x32xf32>
    %42 = arith.divf %40, %41 : vector<1x32xf32>
    %43 = vector.broadcast %42 : vector<1x32xf32> to vector<32x32xf32>
    %44 = arith.subf %36, %43 : vector<32x32xf32>
    %45 = vector.broadcast %42 : vector<1x32xf32> to vector<32x32xf32>
    %46 = arith.subf %36, %45 : vector<32x32xf32>
    %47 = arith.mulf %44, %46 : vector<32x32xf32>
    %cst_30 = arith.constant dense<0.000000e+00> : vector<32xf32>
    %48 = vector.multi_reduction <add>, %47, %cst_30 [0] : vector<32x32xf32> to vector<32xf32>
    %49 = vector.shape_cast %48 : vector<32xf32> to vector<1x32xf32>
    %cst_31 = arith.constant 3.200000e+01 : f32
    %50 = vector.broadcast %cst_31 : f32 to vector<1x32xf32>
    %51 = arith.divf %49, %50 : vector<1x32xf32>
    %52 = vector.broadcast %42 : vector<1x32xf32> to vector<32x32xf32>
    %53 = arith.subf %36, %52 : vector<32x32xf32>
    %cst_32 = arith.constant 9.99999974E-6 : f32
    %54 = vector.broadcast %cst_32 : f32 to vector<1x32xf32>
    %55 = arith.addf %51, %54 : vector<1x32xf32>
    %56 = math.rsqrt %55 : vector<1x32xf32>
    %57 = vector.broadcast %56 : vector<1x32xf32> to vector<32x32xf32>
    %58 = arith.mulf %53, %57 : vector<32x32xf32>
    %59 = vector.broadcast %37 : vector<1x32xf32> to vector<32x32xf32>
    %60 = arith.mulf %58, %59 : vector<32x32xf32>
    %61 = vector.broadcast %38 : vector<1x32xf32> to vector<32x32xf32>
    %62 = arith.addf %60, %61 : vector<32x32xf32>
    %c1 = arith.constant 1 : index
    %63 = memref.load %arg0[%c1] : memref<3xf32, #tpu.memory_space<smem>>
    %cst_33 = arith.constant 0.000000e+00 : f32
    %64 = vector.broadcast %cst_33 : f32 to vector<32x32xf32>
    %65 = arith.cmpf ogt, %62, %64 : vector<32x32xf32>
    %66 = vector.broadcast %63 : f32 to vector<32x32xf32>
    %67 = arith.mulf %66, %62 : vector<32x32xf32>
    %68 = arith.select %65, %62, %67 : vector<32x32xi1>, vector<32x32xf32>
    %c0_34 = arith.constant 0 : index
    %c0_35 = arith.constant 0 : index
    %69 = vector.load %arg11[%c0_34, %c0_35] : memref<16x32xf32, #tpu.memory_space<vmem>>, vector<16x32xf32>
    %70 = vector.extract_strided_slice %68 {offsets = [0, 0], sizes = [32, 16], strides = [1, 1]} : vector<32x32xf32> to vector<32x16xf32>
    %cst_36 = arith.constant dense<0.000000e+00> : vector<32x32xf32>
    %71 = tpu.matmul %70, %69, %cst_36 {dimension_numbers = #tpu.dot_dimension_numbers<[1], [0], [0], [1], [0, 0, 1, 1], [], []>} : vector<32x16xf32>, vector<16x32xf32>, vector<32x32xf32> -> vector<32x32xf32>
    %72 = vector.extract_strided_slice %68 {offsets = [0, 16], sizes = [32, 16], strides = [1, 1]} : vector<32x32xf32> to vector<32x16xf32>
    %cst_37 = arith.constant dense<0.000000e+00> : vector<32x32xf32>
    %73 = tpu.matmul %72, %69, %cst_37 {dimension_numbers = #tpu.dot_dimension_numbers<[1], [0], [0], [1], [0, 0, 1, 1], [], []>} : vector<32x16xf32>, vector<16x32xf32>, vector<32x32xf32> -> vector<32x32xf32>
    %74 = tpu.concatenate %71, %73 in 1 : vector<32x32xf32>, vector<32x32xf32> -> vector<32x64xf32>
    %c0_38 = arith.constant 0 : index
    %c0_39 = arith.constant 0 : index
    %75 = vector.load %arg12[%c0_38, %c0_39] : memref<1x64xf32, #tpu.memory_space<vmem>>, vector<1x64xf32>
    %76 = vector.broadcast %75 : vector<1x64xf32> to vector<32x64xf32>
    %77 = arith.addf %74, %76 : vector<32x64xf32>
    %c0_40 = arith.constant 0 : index
    %c0_41 = arith.constant 0 : index
    %78 = vector.load %arg13[%c0_40, %c0_41] : memref<1x64xf32, #tpu.memory_space<vmem>>, vector<1x64xf32>
    %c0_42 = arith.constant 0 : index
    %c0_43 = arith.constant 0 : index
    %79 = vector.load %arg14[%c0_42, %c0_43] : memref<1x64xf32, #tpu.memory_space<vmem>>, vector<1x64xf32>
    %cst_44 = arith.constant dense<0.000000e+00> : vector<64xf32>
    %80 = vector.multi_reduction <add>, %77, %cst_44 [0] : vector<32x64xf32> to vector<64xf32>
    %81 = vector.shape_cast %80 : vector<64xf32> to vector<1x64xf32>
    %cst_45 = arith.constant 3.200000e+01 : f32
    %82 = vector.broadcast %cst_45 : f32 to vector<1x64xf32>
    %83 = arith.divf %81, %82 : vector<1x64xf32>
    %84 = vector.broadcast %83 : vector<1x64xf32> to vector<32x64xf32>
    %85 = arith.subf %77, %84 : vector<32x64xf32>
    %86 = vector.broadcast %83 : vector<1x64xf32> to vector<32x64xf32>
    %87 = arith.subf %77, %86 : vector<32x64xf32>
    %88 = arith.mulf %85, %87 : vector<32x64xf32>
    %cst_46 = arith.constant dense<0.000000e+00> : vector<64xf32>
    %89 = vector.multi_reduction <add>, %88, %cst_46 [0] : vector<32x64xf32> to vector<64xf32>
    %90 = vector.shape_cast %89 : vector<64xf32> to vector<1x64xf32>
    %cst_47 = arith.constant 3.200000e+01 : f32
    %91 = vector.broadcast %cst_47 : f32 to vector<1x64xf32>
    %92 = arith.divf %90, %91 : vector<1x64xf32>
    %93 = vector.broadcast %83 : vector<1x64xf32> to vector<32x64xf32>
    %94 = arith.subf %77, %93 : vector<32x64xf32>
    %cst_48 = arith.constant 9.99999974E-6 : f32
    %95 = vector.broadcast %cst_48 : f32 to vector<1x64xf32>
    %96 = arith.addf %92, %95 : vector<1x64xf32>
    %97 = math.rsqrt %96 : vector<1x64xf32>
    %98 = vector.broadcast %97 : vector<1x64xf32> to vector<32x64xf32>
    %99 = arith.mulf %94, %98 : vector<32x64xf32>
    %100 = vector.broadcast %78 : vector<1x64xf32> to vector<32x64xf32>
    %101 = arith.mulf %99, %100 : vector<32x64xf32>
    %102 = vector.broadcast %79 : vector<1x64xf32> to vector<32x64xf32>
    %103 = arith.addf %101, %102 : vector<32x64xf32>
    %c2 = arith.constant 2 : index
    %104 = memref.load %arg0[%c2] : memref<3xf32, #tpu.memory_space<smem>>
    %cst_49 = arith.constant 0.000000e+00 : f32
    %105 = vector.broadcast %cst_49 : f32 to vector<32x64xf32>
    %106 = arith.cmpf ogt, %103, %105 : vector<32x64xf32>
    %107 = vector.broadcast %104 : f32 to vector<32x64xf32>
    %108 = arith.mulf %107, %103 : vector<32x64xf32>
    %109 = arith.select %106, %103, %108 : vector<32x64xi1>, vector<32x64xf32>
    %110 = tpu.concatenate %27, %109 in 1 : vector<32x64xf32>, vector<32x64xf32> -> vector<32x128xf32>
    %c0_50 = arith.constant 0 : index
    %c0_51 = arith.constant 0 : index
    %111 = vector.load %arg15[%c0_50, %c0_51] : memref<32x128xf32, #tpu.memory_space<vmem>>, vector<32x128xf32>
    tpu.vector_store %arg15[%c0_50, %c0_51], %110 {strides = array<i32>} : memref<32x128xf32, #tpu.memory_space<vmem>>, vector<32x128xf32>,
    return
  }
}

</mosaic_0001>

<llo_original>
// kernel: bgrl_forward.1
$region0: #{bgrl_forward.1}
  #allocation0 [shape = 'u32[]', space=smem, size = 0x4, offset = 0x4, fixed_abs, tag = 'smem constant byte address 0x4 - core index']
  #allocation1 [shape = 'u32[144,128]{1,0:T(1,128)}', space=vmem, size = 0x12000, scoped, tag = 'internal scratch']
  %s0 = inlined_call_operand.vmem [shape: f32[3], index: 0, kind: input, shape index: {}]
  %s1 = inlined_call_operand.vmem [shape: f32[32,32], index: 1, kind: input, shape index: {}]
  %s2 = inlined_call_operand.vmem [shape: f32[32,32], index: 2, kind: input, shape index: {}]
  %s3 = inlined_call_operand.vmem [shape: f32[16,32], index: 3, kind: input, shape index: {}]
  %s4 = inlined_call_operand.vmem [shape: f32[1,64], index: 4, kind: input, shape index: {}]
  %s5 = inlined_call_operand.vmem [shape: f32[32,32], index: 5, kind: input, shape index: {}]
  %s6 = inlined_call_operand.vmem [shape: f32[1,64], index: 6, kind: input, shape index: {}]
  %s7 = inlined_call_operand.vmem [shape: f32[32,16], index: 7, kind: input, shape index: {}]
  %s8 = inlined_call_operand.vmem [shape: f32[1,32], index: 8, kind: input, shape index: {}]
  %s9 = inlined_call_operand.vmem [shape: f32[1,32], index: 9, kind: input, shape index: {}]
  %s10 = inlined_call_operand.vmem [shape: f32[1,32], index: 10, kind: input, shape index: {}]
  %s11 = inlined_call_operand.vmem [shape: f32[16,32], index: 11, kind: input, shape index: {}]
  %s12 = inlined_call_operand.vmem [shape: f32[1,64], index: 12, kind: input, shape index: {}]
  %s13 = inlined_call_operand.vmem [shape: f32[1,64], index: 13, kind: input, shape index: {}]
  %s14 = inlined_call_operand.vmem [shape: f32[1,64], index: 14, kind: input, shape index: {}]
  %s15 = inlined_call_operand.vmem [shape: f32[32,128], index: 15, kind: output, shape index: {}]
  %s16 = sld [smem:[#allocation0]]
  $region74: #{bgrl_forward.1} parent=0
    _
  %s18 = ssub.s32 1, %s16
  %s19 = scalar_select 0, %s18, %s16
  $region1: #{bgrl_forward.1} parent=0
    #allocation2 [shape = 'u8[512]{0}', space=smem, size = 0x200, scoped, tag = 'input window, operand 0, single buffered']
    #allocation3 [shape = 's32[1]{0}', space=sflag, size = 0x4, scoped, tag = 'scoped memory for bgrl_forward.1']
    %20 = vsyncpa [#allocation3], 0
    // Predicated region
    $region2: #{bgrl_forward.1} parent=1 // pred_check
      _
    $region3: #{bgrl_forward.1} parent=1 // pred_check_branch
      %22 = sbr.rel (0) target = $region5
    $region4: #{bgrl_forward.1} parent=1 // pred_region
      %s24 = ssub.s32 16, 16
      %25 = vsyncadd [#allocation3], %s24
      %s27 = sshll.u32 %s0, 4
      %s28 = int_to_ptr.vmem [resolvable:$true] %s27
      %30 = dma.vmem_to_smem %s28, 16, [#allocation2], [#allocation3]
    $region5: #{bgrl_forward.1} parent=1 // pred_fallthru
      _
    // Predicated region
    $region6: #{bgrl_forward.1} parent=1 // pred_check
      _
    $region7: #{bgrl_forward.1} parent=1 // pred_check_branch
      %32 = sbr.rel (0) target = $region9
    $region8: #{bgrl_forward.1} parent=1 // pred_region
      _
    $region9: #{bgrl_forward.1} parent=1 // pred_fallthru
      _
    // Predicated region
    $region10: #{bgrl_forward.1} parent=1 // pred_check
      _
    $region11: #{bgrl_forward.1} parent=1 // pred_check_branch
      %34 = sbr.rel (0) target = $region13
    $region12: #{bgrl_forward.1} parent=1 // pred_region
      _
    $region13: #{bgrl_forward.1} parent=1 // pred_fallthru
      _
    // Predicated region
    $region14: #{bgrl_forward.1} parent=1 // pred_check
      _
    $region15: #{bgrl_forward.1} parent=1 // pred_check_branch
      %36 = sbr.rel (0) target = $region17
    $region16: #{bgrl_forward.1} parent=1 // pred_region
      _
    $region17: #{bgrl_forward.1} parent=1 // pred_fallthru
      _
    // Predicated region
    $region18: #{bgrl_forward.1} parent=1 // pred_check
      _
    $region19: #{bgrl_forward.1} parent=1 // pred_check_branch
      %38 = sbr.rel (0) target = $region21
    $region20: #{bgrl_forward.1} parent=1 // pred_region
      _
    $region21: #{bgrl_forward.1} parent=1 // pred_fallthru
      _
    // Predicated region
    $region22: #{bgrl_forward.1} parent=1 // pred_check
      _
    $region23: #{bgrl_forward.1} parent=1 // pred_check_branch
      %40 = sbr.rel (0) target = $region25
    $region24: #{bgrl_forward.1} parent=1 // pred_region
      _
    $region25: #{bgrl_forward.1} parent=1 // pred_fallthru
      _
    // Predicated region
    $region26: #{bgrl_forward.1} parent=1 // pred_check
      _
    $region27: #{bgrl_forward.1} parent=1 // pred_check_branch
      %42 = sbr.rel (0) target = $region29
    $region28: #{bgrl_forward.1} parent=1 // pred_region
      _
    $region29: #{bgrl_forward.1} parent=1 // pred_fallthru
      _
    // Predicated region
    $region30: #{bgrl_forward.1} parent=1 // pred_check
      _
    $region31: #{bgrl_forward.1} parent=1 // pred_check_branch
      %44 = sbr.rel (0) target = $region33
    $region32: #{bgrl_forward.1} parent=1 // pred_region
      _
    $region33: #{bgrl_forward.1} parent=1 // pred_fallthru
      _
    // Predicated region
    $region34: #{bgrl_forward.1} parent=1 // pred_check
      _
    $region35: #{bgrl_forward.1} parent=1 // pred_check_branch
      %46 = sbr.rel (0) target = $region37
    $region36: #{bgrl_forward.1} parent=1 // pred_region
      _
    $region37: #{bgrl_forward.1} parent=1 // pred_fallthru
      _
    // Predicated region
    $region38: #{bgrl_forward.1} parent=1 // pred_check
      _
    $region39: #{bgrl_forward.1} parent=1 // pred_check_branch
      %48 = sbr.rel (0) target = $region41
    $region40: #{bgrl_forward.1} parent=1 // pred_region
      _
    $region41: #{bgrl_forward.1} parent=1 // pred_fallthru
      _
    // Predicated region
    $region42: #{bgrl_forward.1} parent=1 // pred_check
      _
    $region43: #{bgrl_forward.1} parent=1 // pred_check_branch
      %50 = sbr.rel (0) target = $region45
    $region44: #{bgrl_forward.1} parent=1 // pred_region
      _
    $region45: #{bgrl_forward.1} parent=1 // pred_fallthru
      _
    // Predicated region
    $region46: #{bgrl_forward.1} parent=1 // pred_check
      _
    $region47: #{bgrl_forward.1} parent=1 // pred_check_branch
      %52 = sbr.rel (0) target = $region49
    $region48: #{bgrl_forward.1} parent=1 // pred_region
      _
    $region49: #{bgrl_forward.1} parent=1 // pred_fallthru
      _
    // Predicated region
    $region50: #{bgrl_forward.1} parent=1 // pred_check
      _
    $region51: #{bgrl_forward.1} parent=1 // pred_check_branch
      %54 = sbr.rel (0) target = $region53
    $region52: #{bgrl_forward.1} parent=1 // pred_region
      _
    $region53: #{bgrl_forward.1} parent=1 // pred_fallthru
      _
    // Predicated region
    $region54: #{bgrl_forward.1} parent=1 // pred_check
      _
    $region55: #{bgrl_forward.1} parent=1 // pred_check_branch
      %56 = sbr.rel (0) target = $region57
    $region56: #{bgrl_forward.1} parent=1 // pred_region
      _
    $region57: #{bgrl_forward.1} parent=1 // pred_fallthru
      _
    // Predicated region
    $region58: #{bgrl_forward.1} parent=1 // pred_check
      _
    $region59: #{bgrl_forward.1} parent=1 // pred_check_branch
      %58 = sbr.rel (0) target = $region61
    $region60: #{bgrl_forward.1} parent=1 // pred_region
      _
    $region61: #{bgrl_forward.1} parent=1 // pred_fallthru
      _
    // Predicated region
    $region62: #{bgrl_forward.1} parent=1 // pred_check
      _
    $region63: #{bgrl_forward.1} parent=1 // pred_check_branch
      %60 = sbr.rel (0) target = $region65
    $region64: #{bgrl_forward.1} parent=1 // pred_region
      %61 = dma.done [#allocation3], 16
    $region65: #{bgrl_forward.1} parent=1 // pred_fallthru
      _
    %62 = sfence
    %v63 = vld [vmem:[%s1] sm:$0xff]
    %v64 = vld [vmem:[%s1 + $0x8] sm:$0xff]
    %v65 = vld [vmem:[%s1 + $0x10] sm:$0xff]
    %v66 = vld [vmem:[%s1 + $0x18] sm:$0xff]
    %v67 = vld [vmem:[%s2] sm:$0xff]
    %v68 = vld [vmem:[%s2 + $0x8] sm:$0xff]
    %v69 = vld [vmem:[%s2 + $0x10] sm:$0xff]
    %v70 = vld [vmem:[%s2 + $0x18] sm:$0xff]
    %vm71 = vcmask 261120
    %v73 = vsel %vm71, %v63, 0
    %v76 = vsel %vm71, %v64, 0
    %v79 = vsel %vm71, %v65, 0
    %v82 = vsel %vm71, %v66, 0
    %84 = vmatprep.subr.mxu0 0.0
    %85 = vmatpush1.msra.mxu0 0.0
    %86 = vmatprep.subr.mxu0 0.0
    %87 = vmatpush1.msra.mxu0 0.0
    %88 = vmatprep.subr.mxu0 0.0
    %89 = vmatpush1.msra.mxu0 0.0
    %90 = vmatprep.subr.mxu0 0.0
    %91 = vmatpush1.msra.mxu0 0.0
    %92 = vmatprep.subr.mxu0 0.0
    %93 = vmatpush1.msra.mxu0 0.0
    %94 = vmatprep.subr.mxu0 0.0
    %95 = vmatpush1.msra.mxu0 0.0
    %96 = vmatprep.subr.mxu0 0.0
    %97 = vmatpush1.msra.mxu0 0.0
    %98 = vmatprep.subr.mxu0 0.0
    %99 = vmatpush1.msra.mxu0 0.0
    %100 = vmatprep.subr.mxu0 0.0
    %101 = vmatpush1.msra.mxu0 0.0
    %102 = vmatprep.subr.mxu0 0.0
    %103 = vmatpush1.msra.mxu0 0.0
    %104 = vmatprep.subr.mxu0 0.0
    %105 = vmatpush1.msra.mxu0 0.0
    %106 = vmatprep.subr.mxu0 0.0
    %107 = vmatpush1.msra.mxu0 0.0
    %108 = vmatprep.subr.mxu0 0.0
    %109 = vmatpush1.msra.mxu0 %v70
    %110 = vmatprep.subr.mxu0 0.0
    %111 = vmatpush1.msra.mxu0 %v69
    %112 = vmatprep.subr.mxu0 0.0
    %113 = vmatpush1.msra.mxu0 %v68
    %114 = vmatprep.subr.mxu0 0.0
    %115 = vmatpush1.msra.mxu0 %v67
    %116 = vmatprep.subr.mxu0 0.0
    %117 = vmatpush2.msra.mxu0 0.0
    %118 = vmatprep.subr.mxu0 0.0
    %119 = vmatpush2.msra.mxu0 0.0
    %120 = vmatprep.subr.mxu0 0.0
    %121 = vmatpush2.msra.mxu0 0.0
    %122 = vmatprep.subr.mxu0 0.0
    %123 = vmatpush2.msra.mxu0 0.0
    %124 = vmatprep.subr.mxu0 0.0
    %125 = vmatpush2.msra.mxu0 0.0
    %126 = vmatprep.subr.mxu0 0.0
    %127 = vmatpush2.msra.mxu0 0.0
    %128 = vmatprep.subr.mxu0 0.0
    %129 = vmatpush2.msra.mxu0 0.0
    %130 = vmatprep.subr.mxu0 0.0
    %131 = vmatpush2.msra.mxu0 0.0
    %132 = vmatprep.subr.mxu0 0.0
    %133 = vmatpush2.msra.mxu0 0.0
    %134 = vmatprep.subr.mxu0 0.0
    %135 = vmatpush2.msra.mxu0 0.0
    %136 = vmatprep.subr.mxu0 0.0
    %137 = vmatpush2.msra.mxu0 0.0
    %138 = vmatprep.subr.mxu0 0.0
    %139 = vmatpush2.msra.mxu0 0.0
    %140 = vmatprep.subr.mxu0 0.0
    %141 = vmatpush2.msra.mxu0 0.0
    %142 = vmatprep.subr.mxu0 0.0
    %143 = vmatpush2.msra.mxu0 0.0
    %144 = vmatprep.subr.mxu0 0.0
    %145 = vmatpush2.msra.mxu0 0.0
    %146 = vmatprep.subr.mxu0 0.0
    %147 = vmatpush2.msra.mxu0 0.0
    %148 = vmatprep.mubr.f32.mxu0 0.0
    %149 = vmatmul.mubr.f32.gmra.mxu0 %v73
    %v150 = vpop.f32.mrf.mxu0
    %v151 = vadd.f32 0.0, %v150
    %v152 = vpop.f32.mrf.mxu0
    %153 = vmatprep.mubr.f32.mxu0 0.0
    %154 = vmatmul.mubr.f32.gmra.mxu0 %v76
    %v155 = vpop.f32.mrf.mxu0
    %v156 = vadd.f32 0.0, %v155
    %v157 = vpop.f32.mrf.mxu0
    %158 = vmatprep.mubr.f32.mxu0 0.0
    %159 = vmatmul.mubr.f32.gmra.mxu0 %v79
    %v160 = vpop.f32.mrf.mxu0
    %v161 = vadd.f32 0.0, %v160
    %v162 = vpop.f32.mrf.mxu0
    %163 = vmatprep.mubr.f32.mxu0 0.0
    %164 = vmatmul.mubr.f32.gmra.mxu0 %v82
    %v165 = vpop.f32.mrf.mxu0
    %v166 = vadd.f32 0.0, %v165
    %v167 = vpop.f32.mrf.mxu0
    %168 = vdwg.mxu0
    %v169 = vld [vmem:[%s3] sm:$0xff]
    %v170 = vld [vmem:[%s3 + $0x8] sm:$0xff]
    %vm171 = vcmask 130048
    %v173 = vsel %vm171, %v151, 0
    %v176 = vsel %vm171, %v156, 0
    %v179 = vsel %vm171, %v161, 0
    %v182 = vsel %vm171, %v166, 0
    %184 = vmatprep.subr.mxu0 0.0
    %185 = vmatpush1.msra.mxu0 0.0
    %186 = vmatprep.subr.mxu0 0.0
    %187 = vmatpush1.msra.mxu0 0.0
    %188 = vmatprep.subr.mxu0 0.0
    %189 = vmatpush1.msra.mxu0 0.0
    %190 = vmatprep.subr.mxu0 0.0
    %191 = vmatpush1.msra.mxu0 0.0
    %192 = vmatprep.subr.mxu0 0.0
    %193 = vmatpush1.msra.mxu0 0.0
    %194 = vmatprep.subr.mxu0 0.0
    %195 = vmatpush1.msra.mxu0 0.0
    %196 = vmatprep.subr.mxu0 0.0
    %197 = vmatpush1.msra.mxu0 0.0
    %198 = vmatprep.subr.mxu0 0.0
    %199 = vmatpush1.msra.mxu0 0.0
    %200 = vmatprep.subr.mxu0 0.0
    %201 = vmatpush1.msra.mxu0 0.0
    %202 = vmatprep.subr.mxu0 0.0
    %203 = vmatpush1.msra.mxu0 0.0
    %204 = vmatprep.subr.mxu0 0.0
    %205 = vmatpush1.msra.mxu0 0.0
    %206 = vmatprep.subr.mxu0 0.0
    %207 = vmatpush1.msra.mxu0 0.0
    %208 = vmatprep.subr.mxu0 0.0
    %209 = vmatpush1.msra.mxu0 0.0
    %210 = vmatprep.subr.mxu0 0.0
    %211 = vmatpush1.msra.mxu0 0.0
    %212 = vmatprep.subr.mxu0 0.0
    %213 = vmatpush1.msra.mxu0 %v170
    %214 = vmatprep.subr.mxu0 0.0
    %215 = vmatpush1.msra.mxu0 %v169
    %216 = vmatprep.subr.mxu0 0.0
    %217 = vmatpush2.msra.mxu0 0.0
    %218 = vmatprep.subr.mxu0 0.0
    %219 = vmatpush2.msra.mxu0 0.0
    %220 = vmatprep.subr.mxu0 0.0
    %221 = vmatpush2.msra.mxu0 0.0
    %222 = vmatprep.subr.mxu0 0.0
    %223 = vmatpush2.msra.mxu0 0.0
    %224 = vmatprep.subr.mxu0 0.0
    %225 = vmatpush2.msra.mxu0 0.0
    %226 = vmatprep.subr.mxu0 0.0
    %227 = vmatpush2.msra.mxu0 0.0
    %228 = vmatprep.subr.mxu0 0.0
    %229 = vmatpush2.msra.mxu0 0.0
    %230 = vmatprep.subr.mxu0 0.0
    %231 = vmatpush2.msra.mxu0 0.0
    %232 = vmatprep.subr.mxu0 0.0
    %233 = vmatpush2.msra.mxu0 0.0
    %234 = vmatprep.subr.mxu0 0.0
    %235 = vmatpush2.msra.mxu0 0.0
    %236 = vmatprep.subr.mxu0 0.0
    %237 = vmatpush2.msra.mxu0 0.0
    %238 = vmatprep.subr.mxu0 0.0
    %239 = vmatpush2.msra.mxu0 0.0
    %240 = vmatprep.subr.mxu0 0.0
    %241 = vmatpush2.msra.mxu0 0.0
    %242 = vmatprep.subr.mxu0 0.0
    %243 = vmatpush2.msra.mxu0 0.0
    %244 = vmatprep.subr.mxu0 0.0
    %245 = vmatpush2.msra.mxu0 0.0
    %246 = vmatprep.subr.mxu0 0.0
    %247 = vmatpush2.msra.mxu0 0.0
    %248 = vmatprep.mubr.f32.mxu0 0.0
    %249 = vmatmul.mubr.f32.gmra.mxu0 %v173
    %v250 = vpop.f32.mrf.mxu0
    %v251 = vadd.f32 0.0, %v250
    %v252 = vpop.f32.mrf.mxu0
    %253 = vmatprep.mubr.f32.mxu0 0.0
    %254 = vmatmul.mubr.f32.gmra.mxu0 %v176
    %v255 = vpop.f32.mrf.mxu0
    %v256 = vadd.f32 0.0, %v255
    %v257 = vpop.f32.mrf.mxu0
    %258 = vmatprep.mubr.f32.mxu0 0.0
    %259 = vmatmul.mubr.f32.gmra.mxu0 %v179
    %v260 = vpop.f32.mrf.mxu0
    %v261 = vadd.f32 0.0, %v260
    %v262 = vpop.f32.mrf.mxu0
    %263 = vmatprep.mubr.f32.mxu0 0.0
    %264 = vmatmul.mubr.f32.gmra.mxu0 %v182
    %v265 = vpop.f32.mrf.mxu0
    %v266 = vadd.f32 0.0, %v265
    %v267 = vpop.f32.mrf.mxu0
    %268 = vdwg.mxu0
    %269 = vrot.lane.b32.xlu0 %v151, 112
    %v270 = vpop.permute.xlu0 %269
    %271 = vrot.lane.b32.xlu0 %v156, 112
    %v272 = vpop.permute.xlu0 %271
    %273 = vrot.lane.b32.xlu0 %v161, 112
    %v274 = vpop.permute.xlu0 %273
    %275 = vrot.lane.b32.xlu0 %v166, 112
    %v276 = vpop.permute.xlu0 %275
    %v277 = vsel %vm171, %v270, 0
    %v279 = vsel %vm171, %v272, 0
    %v281 = vsel %vm171, %v274, 0
    %v283 = vsel %vm171, %v276, 0
    %285 = vmatprep.subr.mxu0 0.0
    %286 = vmatpush1.msra.mxu0 0.0
    %287 = vmatprep.subr.mxu0 0.0
    %288 = vmatpush1.msra.mxu0 0.0
    %289 = vmatprep.subr.mxu0 0.0
    %290 = vmatpush1.msra.mxu0 0.0
    %291 = vmatprep.subr.mxu0 0.0
    %292 = vmatpush1.msra.mxu0 0.0
    %293 = vmatprep.subr.mxu0 0.0
    %294 = vmatpush1.msra.mxu0 0.0
    %295 = vmatprep.subr.mxu0 0.0
    %296 = vmatpush1.msra.mxu0 0.0
    %297 = vmatprep.subr.mxu0 0.0
    %298 = vmatpush1.msra.mxu0 0.0
    %299 = vmatprep.subr.mxu0 0.0
    %300 = vmatpush1.msra.mxu0 0.0
    %301 = vmatprep.subr.mxu0 0.0
    %302 = vmatpush1.msra.mxu0 0.0
    %303 = vmatprep.subr.mxu0 0.0
    %304 = vmatpush1.msra.mxu0 0.0
    %305 = vmatprep.subr.mxu0 0.0
    %306 = vmatpush1.msra.mxu0 0.0
    %307 = vmatprep.subr.mxu0 0.0
    %308 = vmatpush1.msra.mxu0 0.0
    %309 = vmatprep.subr.mxu0 0.0
    %310 = vmatpush1.msra.mxu0 0.0
    %311 = vmatprep.subr.mxu0 0.0
    %312 = vmatpush1.msra.mxu0 0.0
    %313 = vmatprep.subr.mxu0 0.0
    %314 = vmatpush1.msra.mxu0 %v170
    %315 = vmatprep.subr.mxu0 0.0
    %316 = vmatpush1.msra.mxu0 %v169
    %317 = vmatprep.subr.mxu0 0.0
    %318 = vmatpush2.msra.mxu0 0.0
    %319 = vmatprep.subr.mxu0 0.0
    %320 = vmatpush2.msra.mxu0 0.0
    %321 = vmatprep.subr.mxu0 0.0
    %322 = vmatpush2.msra.mxu0 0.0
    %323 = vmatprep.subr.mxu0 0.0
    %324 = vmatpush2.msra.mxu0 0.0
    %325 = vmatprep.subr.mxu0 0.0
    %326 = vmatpush2.msra.mxu0 0.0
    %327 = vmatprep.subr.mxu0 0.0
    %328 = vmatpush2.msra.mxu0 0.0
    %329 = vmatprep.subr.mxu0 0.0
    %330 = vmatpush2.msra.mxu0 0.0
    %331 = vmatprep.subr.mxu0 0.0
    %332 = vmatpush2.msra.mxu0 0.0
    %333 = vmatprep.subr.mxu0 0.0
    %334 = vmatpush2.msra.mxu0 0.0
    %335 = vmatprep.subr.mxu0 0.0
    %336 = vmatpush2.msra.mxu0 0.0
    %337 = vmatprep.subr.mxu0 0.0
    %338 = vmatpush2.msra.mxu0 0.0
    %339 = vmatprep.subr.mxu0 0.0
    %340 = vmatpush2.msra.mxu0 0.0
    %341 = vmatprep.subr.mxu0 0.0
    %342 = vmatpush2.msra.mxu0 0.0
    %343 = vmatprep.subr.mxu0 0.0
    %344 = vmatpush2.msra.mxu0 0.0
    %345 = vmatprep.subr.mxu0 0.0
    %346 = vmatpush2.msra.mxu0 0.0
    %347 = vmatprep.subr.mxu0 0.0
    %348 = vmatpush2.msra.mxu0 0.0
    %349 = vmatprep.mubr.f32.mxu0 0.0
    %350 = vmatmul.mubr.f32.gmra.mxu0 %v277
    %v351 = vpop.f32.mrf.mxu0
    %v352 = vadd.f32 0.0, %v351
    %v353 = vpop.f32.mrf.mxu0
    %354 = vmatprep.mubr.f32.mxu0 0.0
    %355 = vmatmul.mubr.f32.gmra.mxu0 %v279
    %v356 = vpop.f32.mrf.mxu0
    %v357 = vadd.f32 0.0, %v356
    %v358 = vpop.f32.mrf.mxu0
    %359 = vmatprep.mubr.f32.mxu0 0.0
    %360 = vmatmul.mubr.f32.gmra.mxu0 %v281
    %v361 = vpop.f32.mrf.mxu0
    %v362 = vadd.f32 0.0, %v361
    %v363 = vpop.f32.mrf.mxu0
    %364 = vmatprep.mubr.f32.mxu0 0.0
    %365 = vmatmul.mubr.f32.gmra.mxu0 %v283
    %v366 = vpop.f32.mrf.mxu0
    %v367 = vadd.f32 0.0, %v366
    %v368 = vpop.f32.mrf.mxu0
    %369 = vdwg.mxu0
    %374 = vrot.lane.b32.xlu0 %v352, 32
    %v375 = vpop.permute.xlu0 %374
    %376 = vrot.lane.b32.xlu0 %v357, 32
    %v377 = vpop.permute.xlu0 %376
    %378 = vrot.lane.b32.xlu0 %v362, 32
    %v379 = vpop.permute.xlu0 %378
    %380 = vrot.lane.b32.xlu0 %v367, 32
    %v381 = vpop.permute.xlu0 %380
    %v386 = vsel %vm71, %v251, %v375
    %v387 = vsel %vm71, %v256, %v377
    %v388 = vsel %vm71, %v261, %v379
    %v389 = vsel %vm71, %v266, %v381
    %v390 = vld [vmem:[%s4] sm:$0x1]
    %v392 = vlaneseq
    %v393 = vshrl.u32 %v392, 7
    %v394 = vsub.s32 0, %v393
    %v395 = vrot.slane %v390, %v394
    %v397 = vadd.f32 %v386, %v395
    %v398 = vadd.f32 %v387, %v395
    %v399 = vadd.f32 %v388, %v395
    %v400 = vadd.f32 %v389, %v395
    %s401 = sld [smem:[#allocation2]]
    %vm402 = vcmp.gt.f32.partialorder %v397, 0.0
    %vm403 = vcmp.gt.f32.partialorder %v398, 0.0
    %vm404 = vcmp.gt.f32.partialorder %v399, 0.0
    %vm405 = vcmp.gt.f32.partialorder %v400, 0.0
    %v406 = vstv %s401
    %v407 = vmul.f32 %v406, %v397
    %v408 = vmul.f32 %v406, %v398
    %v409 = vmul.f32 %v406, %v399
    %v410 = vmul.f32 %v406, %v400
    %v411 = vsel %vm402, %v397, %v407
    %v412 = vsel %vm403, %v398, %v408
    %v413 = vsel %vm404, %v399, %v409
    %v414 = vsel %vm405, %v400, %v410
    %415 = vmatprep.subr.mxu0 0.0
    %416 = vmatpush1.msra.mxu0 0.0
    %417 = vmatprep.subr.mxu0 0.0
    %418 = vmatpush1.msra.mxu0 0.0
    %419 = vmatprep.subr.mxu0 0.0
    %420 = vmatpush1.msra.mxu0 0.0
    %421 = vmatprep.subr.mxu0 0.0
    %422 = vmatpush1.msra.mxu0 0.0
    %423 = vmatprep.subr.mxu0 0.0
    %424 = vmatpush1.msra.mxu0 0.0
    %425 = vmatprep.subr.mxu0 0.0
    %426 = vmatpush1.msra.mxu0 0.0
    %427 = vmatprep.subr.mxu0 0.0
    %428 = vmatpush1.msra.mxu0 0.0
    %429 = vmatprep.subr.mxu0 0.0
    %430 = vmatpush1.msra.mxu0 0.0
    %431 = vmatprep.subr.mxu0 0.0
    %432 = vmatpush1.msra.mxu0 0.0
    %433 = vmatprep.subr.mxu0 0.0
    %434 = vmatpush1.msra.mxu0 0.0
    %435 = vmatprep.subr.mxu0 0.0
    %436 = vmatpush1.msra.mxu0 0.0
    %437 = vmatprep.subr.mxu0 0.0
    %438 = vmatpush1.msra.mxu0 0.0
    %439 = vmatprep.subr.mxu0 0.0
    %440 = vmatpush1.msra.mxu0 %v414
    %441 = vmatprep.subr.mxu0 0.0
    %442 = vmatpush1.msra.mxu0 %v413
    %443 = vmatprep.subr.mxu0 0.0
    %444 = vmatpush1.msra.mxu0 %v412
    %445 = vmatprep.subr.mxu0 0.0
    %446 = vmatpush1.msra.mxu0 %v411
    %447 = vmatprep.subr.mxu0 0.0
    %448 = vmatpush2.msra.mxu0 0.0
    %449 = vmatprep.subr.mxu0 0.0
    %450 = vmatpush2.msra.mxu0 0.0
    %451 = vmatprep.subr.mxu0 0.0
    %452 = vmatpush2.msra.mxu0 0.0
    %453 = vmatprep.subr.mxu0 0.0
    %454 = vmatpush2.msra.mxu0 0.0
    %455 = vmatprep.subr.mxu0 0.0
    %456 = vmatpush2.msra.mxu0 0.0
    %457 = vmatprep.subr.mxu0 0.0
    %458 = vmatpush2.msra.mxu0 0.0
    %459 = vmatprep.subr.mxu0 0.0
    %460 = vmatpush2.msra.mxu0 0.0
    %461 = vmatprep.subr.mxu0 0.0
    %462 = vmatpush2.msra.mxu0 0.0
    %463 = vmatprep.subr.mxu0 0.0
    %464 = vmatpush2.msra.mxu0 0.0
    %465 = vmatprep.subr.mxu0 0.0
    %466 = vmatpush2.msra.mxu0 0.0
    %467 = vmatprep.subr.mxu0 0.0
    %468 = vmatpush2.msra.mxu0 0.0
    %469 = vmatprep.subr.mxu0 0.0
    %470 = vmatpush2.msra.mxu0 0.0
    %471 = vmatprep.subr.mxu0 0.0
    %472 = vmatpush2.msra.mxu0 0.0
    %473 = vmatprep.subr.mxu0 0.0
    %474 = vmatpush2.msra.mxu0 0.0
    %475 = vmatprep.subr.mxu0 0.0
    %476 = vmatpush2.msra.mxu0 0.0
    %477 = vmatprep.subr.mxu0 0.0
    %478 = vmatpush2.msra.mxu0 0.0
    %479 = vmatprep.mubr.f32.mxu0 0.0
    %480 = vmatmul.mubr.f32.gmra.mxu0 %v73
    %v481 = vpop.f32.mrf.mxu0
    %v482 = vadd.f32 0.0, %v481
    %v483 = vpop.f32.mrf.mxu0
    %484 = vmatprep.mubr.f32.mxu0 0.0
    %485 = vmatmul.mubr.f32.gmra.mxu0 %v76
    %v486 = vpop.f32.mrf.mxu0
    %v487 = vadd.f32 0.0, %v486
    %v488 = vpop.f32.mrf.mxu0
    %489 = vmatprep.mubr.f32.mxu0 0.0
    %490 = vmatmul.mubr.f32.gmra.mxu0 %v79
    %v491 = vpop.f32.mrf.mxu0
    %v492 = vadd.f32 0.0, %v491
    %v493 = vpop.f32.mrf.mxu0
    %494 = vmatprep.mubr.f32.mxu0 0.0
    %495 = vmatmul.mubr.f32.gmra.mxu0 %v82
    %v496 = vpop.f32.mrf.mxu0
    %v497 = vadd.f32 0.0, %v496
    %v498 = vpop.f32.mrf.mxu0
    %499 = vdwg.mxu0
    %v500 = vld [vmem:[%s5] sm:$0xff]
    %v501 = vld [vmem:[%s5 + $0x8] sm:$0xff]
    %v502 = vld [vmem:[%s5 + $0x10] sm:$0xff]
    %v503 = vld [vmem:[%s5 + $0x18] sm:$0xff]
    %v505 = vsel %vm71, %v482, 0
    %v508 = vsel %vm71, %v487, 0
    %v511 = vsel %vm71, %v492, 0
    %v514 = vsel %vm71, %v497, 0
    %516 = vmatprep.subr.mxu0 0.0
    %517 = vmatpush1.msra.mxu0 0.0
    %518 = vmatprep.subr.mxu0 0.0
    %519 = vmatpush1.msra.mxu0 0.0
    %520 = vmatprep.subr.mxu0 0.0
    %521 = vmatpush1.msra.mxu0 0.0
    %522 = vmatprep.subr.mxu0 0.0
    %523 = vmatpush1.msra.mxu0 0.0
    %524 = vmatprep.subr.mxu0 0.0
    %525 = vmatpush1.msra.mxu0 0.0
    %526 = vmatprep.subr.mxu0 0.0
    %527 = vmatpush1.msra.mxu0 0.0
    %528 = vmatprep.subr.mxu0 0.0
    %529 = vmatpush1.msra.mxu0 0.0
    %530 = vmatprep.subr.mxu0 0.0
    %531 = vmatpush1.msra.mxu0 0.0
    %532 = vmatprep.subr.mxu0 0.0
    %533 = vmatpush1.msra.mxu0 0.0
    %534 = vmatprep.subr.mxu0 0.0
    %535 = vmatpush1.msra.mxu0 0.0
    %536 = vmatprep.subr.mxu0 0.0
    %537 = vmatpush1.msra.mxu0 0.0
    %538 = vmatprep.subr.mxu0 0.0
    %539 = vmatpush1.msra.mxu0 0.0
    %540 = vmatprep.subr.mxu0 0.0
    %541 = vmatpush1.msra.mxu0 %v503
    %542 = vmatprep.subr.mxu0 0.0
    %543 = vmatpush1.msra.mxu0 %v502
    %544 = vmatprep.subr.mxu0 0.0
    %545 = vmatpush1.msra.mxu0 %v501
    %546 = vmatprep.subr.mxu0 0.0
    %547 = vmatpush1.msra.mxu0 %v500
    %548 = vmatprep.subr.mxu0 0.0
    %549 = vmatpush2.msra.mxu0 0.0
    %550 = vmatprep.subr.mxu0 0.0
    %551 = vmatpush2.msra.mxu0 0.0
    %552 = vmatprep.subr.mxu0 0.0
    %553 = vmatpush2.msra.mxu0 0.0
    %554 = vmatprep.subr.mxu0 0.0
    %555 = vmatpush2.msra.mxu0 0.0
    %556 = vmatprep.subr.mxu0 0.0
    %557 = vmatpush2.msra.mxu0 0.0
    %558 = vmatprep.subr.mxu0 0.0
    %559 = vmatpush2.msra.mxu0 0.0
    %560 = vmatprep.subr.mxu0 0.0
    %561 = vmatpush2.msra.mxu0 0.0
    %562 = vmatprep.subr.mxu0 0.0
    %563 = vmatpush2.msra.mxu0 0.0
    %564 = vmatprep.subr.mxu0 0.0
    %565 = vmatpush2.msra.mxu0 0.0
    %566 = vmatprep.subr.mxu0 0.0
    %567 = vmatpush2.msra.mxu0 0.0
    %568 = vmatprep.subr.mxu0 0.0
    %569 = vmatpush2.msra.mxu0 0.0
    %570 = vmatprep.subr.mxu0 0.0
    %571 = vmatpush2.msra.mxu0 0.0
    %572 = vmatprep.subr.mxu0 0.0
    %573 = vmatpush2.msra.mxu0 0.0
    %574 = vmatprep.subr.mxu0 0.0
    %575 = vmatpush2.msra.mxu0 0.0
    %576 = vmatprep.subr.mxu0 0.0
    %577 = vmatpush2.msra.mxu0 0.0
    %578 = vmatprep.subr.mxu0 0.0
    %579 = vmatpush2.msra.mxu0 0.0
    %580 = vmatprep.mubr.f32.mxu0 0.0
    %581 = vmatmul.mubr.f32.gmra.mxu0 %v505
    %v582 = vpop.f32.mrf.mxu0
    %v583 = vadd.f32 0.0, %v582
    %v584 = vpop.f32.mrf.mxu0
    %585 = vmatprep.mubr.f32.mxu0 0.0
    %586 = vmatmul.mubr.f32.gmra.mxu0 %v508
    %v587 = vpop.f32.mrf.mxu0
    %v588 = vadd.f32 0.0, %v587
    %v589 = vpop.f32.mrf.mxu0
    %590 = vmatprep.mubr.f32.mxu0 0.0
    %591 = vmatmul.mubr.f32.gmra.mxu0 %v511
    %v592 = vpop.f32.mrf.mxu0
    %v593 = vadd.f32 0.0, %v592
    %v594 = vpop.f32.mrf.mxu0
    %595 = vmatprep.mubr.f32.mxu0 0.0
    %596 = vmatmul.mubr.f32.gmra.mxu0 %v514
    %v597 = vpop.f32.mrf.mxu0
    %v598 = vadd.f32 0.0, %v597
    %v599 = vpop.f32.mrf.mxu0
    %600 = vdwg.mxu0
    %601 = vrot.lane.b32.xlu0 %v482, 96
    %v602 = vpop.permute.xlu0 %601
    %603 = vrot.lane.b32.xlu0 %v487, 96
    %v604 = vpop.permute.xlu0 %603
    %605 = vrot.lane.b32.xlu0 %v492, 96
    %v606 = vpop.permute.xlu0 %605
    %607 = vrot.lane.b32.xlu0 %v497, 96
    %v608 = vpop.permute.xlu0 %607
    %v609 = vsel %vm71, %v602, 0
    %v611 = vsel %vm71, %v604, 0
    %v613 = vsel %vm71, %v606, 0
    %v615 = vsel %vm71, %v608, 0
    %617 = vmatprep.subr.mxu0 0.0
    %618 = vmatpush1.msra.mxu0 0.0
    %619 = vmatprep.subr.mxu0 0.0
    %620 = vmatpush1.msra.mxu0 0.0
    %621 = vmatprep.subr.mxu0 0.0
    %622 = vmatpush1.msra.mxu0 0.0
    %623 = vmatprep.subr.mxu0 0.0
    %624 = vmatpush1.msra.mxu0 0.0
    %625 = vmatprep.subr.mxu0 0.0
    %626 = vmatpush1.msra.mxu0 0.0
    %627 = vmatprep.subr.mxu0 0.0
    %628 = vmatpush1.msra.mxu0 0.0
    %629 = vmatprep.subr.mxu0 0.0
    %630 = vmatpush1.msra.mxu0 0.0
    %631 = vmatprep.subr.mxu0 0.0
    %632 = vmatpush1.msra.mxu0 0.0
    %633 = vmatprep.subr.mxu0 0.0
    %634 = vmatpush1.msra.mxu0 0.0
    %635 = vmatprep.subr.mxu0 0.0
    %636 = vmatpush1.msra.mxu0 0.0
    %637 = vmatprep.subr.mxu0 0.0
    %638 = vmatpush1.msra.mxu0 0.0
    %639 = vmatprep.subr.mxu0 0.0
    %640 = vmatpush1.msra.mxu0 0.0
    %641 = vmatprep.subr.mxu0 0.0
    %642 = vmatpush1.msra.mxu0 %v503
    %643 = vmatprep.subr.mxu0 0.0
    %644 = vmatpush1.msra.mxu0 %v502
    %645 = vmatprep.subr.mxu0 0.0
    %646 = vmatpush1.msra.mxu0 %v501
    %647 = vmatprep.subr.mxu0 0.0
    %648 = vmatpush1.msra.mxu0 %v500
    %649 = vmatprep.subr.mxu0 0.0
    %650 = vmatpush2.msra.mxu0 0.0
    %651 = vmatprep.subr.mxu0 0.0
    %652 = vmatpush2.msra.mxu0 0.0
    %653 = vmatprep.subr.mxu0 0.0
    %654 = vmatpush2.msra.mxu0 0.0
    %655 = vmatprep.subr.mxu0 0.0
    %656 = vmatpush2.msra.mxu0 0.0
    %657 = vmatprep.subr.mxu0 0.0
    %658 = vmatpush2.msra.mxu0 0.0
    %659 = vmatprep.subr.mxu0 0.0
    %660 = vmatpush2.msra.mxu0 0.0
    %661 = vmatprep.subr.mxu0 0.0
    %662 = vmatpush2.msra.mxu0 0.0
    %663 = vmatprep.subr.mxu0 0.0
    %664 = vmatpush2.msra.mxu0 0.0
    %665 = vmatprep.subr.mxu0 0.0
    %666 = vmatpush2.msra.mxu0 0.0
    %667 = vmatprep.subr.mxu0 0.0
    %668 = vmatpush2.msra.mxu0 0.0
    %669 = vmatprep.subr.mxu0 0.0
    %670 = vmatpush2.msra.mxu0 0.0
    %671 = vmatprep.subr.mxu0 0.0
    %672 = vmatpush2.msra.mxu0 0.0
    %673 = vmatprep.subr.mxu0 0.0
    %674 = vmatpush2.msra.mxu0 0.0
    %675 = vmatprep.subr.mxu0 0.0
    %676 = vmatpush2.msra.mxu0 0.0
    %677 = vmatprep.subr.mxu0 0.0
    %678 = vmatpush2.msra.mxu0 0.0
    %679 = vmatprep.subr.mxu0 0.0
    %680 = vmatpush2.msra.mxu0 0.0
    %681 = vmatprep.mubr.f32.mxu0 0.0
    %682 = vmatmul.mubr.f32.gmra.mxu0 %v609
    %v683 = vpop.f32.mrf.mxu0
    %v684 = vadd.f32 0.0, %v683
    %v685 = vpop.f32.mrf.mxu0
    %686 = vmatprep.mubr.f32.mxu0 0.0
    %687 = vmatmul.mubr.f32.gmra.mxu0 %v611
    %v688 = vpop.f32.mrf.mxu0
    %v689 = vadd.f32 0.0, %v688
    %v690 = vpop.f32.mrf.mxu0
    %691 = vmatprep.mubr.f32.mxu0 0.0
    %692 = vmatmul.mubr.f32.gmra.mxu0 %v613
    %v693 = vpop.f32.mrf.mxu0
    %v694 = vadd.f32 0.0, %v693
    %v695 = vpop.f32.mrf.mxu0
    %696 = vmatprep.mubr.f32.mxu0 0.0
    %697 = vmatmul.mubr.f32.gmra.mxu0 %v615
    %v698 = vpop.f32.mrf.mxu0
    %v699 = vadd.f32 0.0, %v698
    %v700 = vpop.f32.mrf.mxu0
    %701 = vdwg.mxu0
    %706 = vrot.lane.b32.xlu0 %v684, 32
    %v707 = vpop.permute.xlu0 %706
    %708 = vrot.lane.b32.xlu0 %v689, 32
    %v709 = vpop.permute.xlu0 %708
    %710 = vrot.lane.b32.xlu0 %v694, 32
    %v711 = vpop.permute.xlu0 %710
    %712 = vrot.lane.b32.xlu0 %v699, 32
    %v713 = vpop.permute.xlu0 %712
    %v718 = vsel %vm71, %v583, %v707
    %v719 = vsel %vm71, %v588, %v709
    %v720 = vsel %vm71, %v593, %v711
    %v721 = vsel %vm71, %v598, %v713
    %v722 = vld [vmem:[%s6] sm:$0x1]
    %v724 = vlaneseq
    %v725 = vshrl.u32 %v724, 7
    %v726 = vsub.s32 0, %v725
    %v727 = vrot.slane %v722, %v726
    %v729 = vadd.f32 %v718, %v727
    %v730 = vadd.f32 %v719, %v727
    %v731 = vadd.f32 %v720, %v727
    %v732 = vadd.f32 %v721, %v727
    %v733 = vld [vmem:[%s7] sm:$0xff]
    %v734 = vld [vmem:[%s7 + $0x8] sm:$0xff]
    %v735 = vld [vmem:[%s7 + $0x10] sm:$0xff]
    %v736 = vld [vmem:[%s7 + $0x18] sm:$0xff]
    %v738 = vsel %vm71, %v729, 0
    %v741 = vsel %vm71, %v730, 0
    %v744 = vsel %vm71, %v731, 0
    %v747 = vsel %vm71, %v732, 0
    %749 = vmatprep.subr.mxu0 0.0
    %750 = vmatpush1.msra.mxu0 0.0
    %751 = vmatprep.subr.mxu0 0.0
    %752 = vmatpush1.msra.mxu0 0.0
    %753 = vmatprep.subr.mxu0 0.0
    %754 = vmatpush1.msra.mxu0 0.0
    %755 = vmatprep.subr.mxu0 0.0
    %756 = vmatpush1.msra.mxu0 0.0
    %757 = vmatprep.subr.mxu0 0.0
    %758 = vmatpush1.msra.mxu0 0.0
    %759 = vmatprep.subr.mxu0 0.0
    %760 = vmatpush1.msra.mxu0 0.0
    %761 = vmatprep.subr.mxu0 0.0
    %762 = vmatpush1.msra.mxu0 0.0
    %763 = vmatprep.subr.mxu0 0.0
    %764 = vmatpush1.msra.mxu0 0.0
    %765 = vmatprep.subr.mxu0 0.0
    %766 = vmatpush1.msra.mxu0 0.0
    %767 = vmatprep.subr.mxu0 0.0
    %768 = vmatpush1.msra.mxu0 0.0
    %769 = vmatprep.subr.mxu0 0.0
    %770 = vmatpush1.msra.mxu0 0.0
    %771 = vmatprep.subr.mxu0 0.0
    %772 = vmatpush1.msra.mxu0 0.0
    %773 = vmatprep.subr.mxu0 0.0
    %774 = vmatpush1.msra.mxu0 %v736
    %775 = vmatprep.subr.mxu0 0.0
    %776 = vmatpush1.msra.mxu0 %v735
    %777 = vmatprep.subr.mxu0 0.0
    %778 = vmatpush1.msra.mxu0 %v734
    %779 = vmatprep.subr.mxu0 0.0
    %780 = vmatpush1.msra.mxu0 %v733
    %781 = vmatprep.subr.mxu0 0.0
    %782 = vmatpush2.msra.mxu0 0.0
    %783 = vmatprep.subr.mxu0 0.0
    %784 = vmatpush2.msra.mxu0 0.0
    %785 = vmatprep.subr.mxu0 0.0
    %786 = vmatpush2.msra.mxu0 0.0
    %787 = vmatprep.subr.mxu0 0.0
    %788 = vmatpush2.msra.mxu0 0.0
    %789 = vmatprep.subr.mxu0 0.0
    %790 = vmatpush2.msra.mxu0 0.0
    %791 = vmatprep.subr.mxu0 0.0
    %792 = vmatpush2.msra.mxu0 0.0
    %793 = vmatprep.subr.mxu0 0.0
    %794 = vmatpush2.msra.mxu0 0.0
    %795 = vmatprep.subr.mxu0 0.0
    %796 = vmatpush2.msra.mxu0 0.0
    %797 = vmatprep.subr.mxu0 0.0
    %798 = vmatpush2.msra.mxu0 0.0
    %799 = vmatprep.subr.mxu0 0.0
    %800 = vmatpush2.msra.mxu0 0.0
    %801 = vmatprep.subr.mxu0 0.0
    %802 = vmatpush2.msra.mxu0 0.0
    %803 = vmatprep.subr.mxu0 0.0
    %804 = vmatpush2.msra.mxu0 0.0
    %805 = vmatprep.subr.mxu0 0.0
    %806 = vmatpush2.msra.mxu0 0.0
    %807 = vmatprep.subr.mxu0 0.0
    %808 = vmatpush2.msra.mxu0 0.0
    %809 = vmatprep.subr.mxu0 0.0
    %810 = vmatpush2.msra.mxu0 0.0
    %811 = vmatprep.subr.mxu0 0.0
    %812 = vmatpush2.msra.mxu0 0.0
    %813 = vmatprep.mubr.f32.mxu0 0.0
    %814 = vmatmul.mubr.f32.gmra.mxu0 %v738
    %v815 = vpop.f32.mrf.mxu0
    %v816 = vadd.f32 0.0, %v815
    %v817 = vpop.f32.mrf.mxu0
    %818 = vmatprep.mubr.f32.mxu0 0.0
    %819 = vmatmul.mubr.f32.gmra.mxu0 %v741
    %v820 = vpop.f32.mrf.mxu0
    %v821 = vadd.f32 0.0, %v820
    %v822 = vpop.f32.mrf.mxu0
    %823 = vmatprep.mubr.f32.mxu0 0.0
    %824 = vmatmul.mubr.f32.gmra.mxu0 %v744
    %v825 = vpop.f32.mrf.mxu0
    %v826 = vadd.f32 0.0, %v825
    %v827 = vpop.f32.mrf.mxu0
    %828 = vmatprep.mubr.f32.mxu0 0.0
    %829 = vmatmul.mubr.f32.gmra.mxu0 %v747
    %v830 = vpop.f32.mrf.mxu0
    %v831 = vadd.f32 0.0, %v830
    %v832 = vpop.f32.mrf.mxu0
    %833 = vdwg.mxu0
    %834 = vrot.lane.b32.xlu0 %v729, 96
    %v835 = vpop.permute.xlu0 %834
    %836 = vrot.lane.b32.xlu0 %v730, 96
    %v837 = vpop.permute.xlu0 %836
    %838 = vrot.lane.b32.xlu0 %v731, 96
    %v839 = vpop.permute.xlu0 %838
    %840 = vrot.lane.b32.xlu0 %v732, 96
    %v841 = vpop.permute.xlu0 %840
    %v842 = vsel %vm71, %v835, 0
    %v844 = vsel %vm71, %v837, 0
    %v846 = vsel %vm71, %v839, 0
    %v848 = vsel %vm71, %v841, 0
    %850 = vmatprep.subr.mxu0 0.0
    %851 = vmatpush1.msra.mxu0 0.0
    %852 = vmatprep.subr.mxu0 0.0
    %853 = vmatpush1.msra.mxu0 0.0
    %854 = vmatprep.subr.mxu0 0.0
    %855 = vmatpush1.msra.mxu0 0.0
    %856 = vmatprep.subr.mxu0 0.0
    %857 = vmatpush1.msra.mxu0 0.0
    %858 = vmatprep.subr.mxu0 0.0
    %859 = vmatpush1.msra.mxu0 0.0
    %860 = vmatprep.subr.mxu0 0.0
    %861 = vmatpush1.msra.mxu0 0.0
    %862 = vmatprep.subr.mxu0 0.0
    %863 = vmatpush1.msra.mxu0 0.0
    %864 = vmatprep.subr.mxu0 0.0
    %865 = vmatpush1.msra.mxu0 0.0
    %866 = vmatprep.subr.mxu0 0.0
    %867 = vmatpush1.msra.mxu0 0.0
    %868 = vmatprep.subr.mxu0 0.0
    %869 = vmatpush1.msra.mxu0 0.0
    %870 = vmatprep.subr.mxu0 0.0
    %871 = vmatpush1.msra.mxu0 0.0
    %872 = vmatprep.subr.mxu0 0.0
    %873 = vmatpush1.msra.mxu0 0.0
    %874 = vmatprep.subr.mxu0 0.0
    %875 = vmatpush1.msra.mxu0 %v736
    %876 = vmatprep.subr.mxu0 0.0
    %877 = vmatpush1.msra.mxu0 %v735
    %878 = vmatprep.subr.mxu0 0.0
    %879 = vmatpush1.msra.mxu0 %v734
    %880 = vmatprep.subr.mxu0 0.0
    %881 = vmatpush1.msra.mxu0 %v733
    %882 = vmatprep.subr.mxu0 0.0
    %883 = vmatpush2.msra.mxu0 0.0
    %884 = vmatprep.subr.mxu0 0.0
    %885 = vmatpush2.msra.mxu0 0.0
    %886 = vmatprep.subr.mxu0 0.0
    %887 = vmatpush2.msra.mxu0 0.0
    %888 = vmatprep.subr.mxu0 0.0
    %889 = vmatpush2.msra.mxu0 0.0
    %890 = vmatprep.subr.mxu0 0.0
    %891 = vmatpush2.msra.mxu0 0.0
    %892 = vmatprep.subr.mxu0 0.0
    %893 = vmatpush2.msra.mxu0 0.0
    %894 = vmatprep.subr.mxu0 0.0
    %895 = vmatpush2.msra.mxu0 0.0
    %896 = vmatprep.subr.mxu0 0.0
    %897 = vmatpush2.msra.mxu0 0.0
    %898 = vmatprep.subr.mxu0 0.0
    %899 = vmatpush2.msra.mxu0 0.0
    %900 = vmatprep.subr.mxu0 0.0
    %901 = vmatpush2.msra.mxu0 0.0
    %902 = vmatprep.subr.mxu0 0.0
    %903 = vmatpush2.msra.mxu0 0.0
    %904 = vmatprep.subr.mxu0 0.0
    %905 = vmatpush2.msra.mxu0 0.0
    %906 = vmatprep.subr.mxu0 0.0
    %907 = vmatpush2.msra.mxu0 0.0
    %908 = vmatprep.subr.mxu0 0.0
    %909 = vmatpush2.msra.mxu0 0.0
    %910 = vmatprep.subr.mxu0 0.0
    %911 = vmatpush2.msra.mxu0 0.0
    %912 = vmatprep.subr.mxu0 0.0
    %913 = vmatpush2.msra.mxu0 0.0
    %914 = vmatprep.mubr.f32.mxu0 0.0
    %915 = vmatmul.mubr.f32.gmra.mxu0 %v842
    %v916 = vpop.f32.mrf.mxu0
    %v917 = vadd.f32 0.0, %v916
    %v918 = vpop.f32.mrf.mxu0
    %919 = vmatprep.mubr.f32.mxu0 0.0
    %920 = vmatmul.mubr.f32.gmra.mxu0 %v844
    %v921 = vpop.f32.mrf.mxu0
    %v922 = vadd.f32 0.0, %v921
    %v923 = vpop.f32.mrf.mxu0
    %924 = vmatprep.mubr.f32.mxu0 0.0
    %925 = vmatmul.mubr.f32.gmra.mxu0 %v846
    %v926 = vpop.f32.mrf.mxu0
    %v927 = vadd.f32 0.0, %v926
    %v928 = vpop.f32.mrf.mxu0
    %929 = vmatprep.mubr.f32.mxu0 0.0
    %930 = vmatmul.mubr.f32.gmra.mxu0 %v848
    %v931 = vpop.f32.mrf.mxu0
    %v932 = vadd.f32 0.0, %v931
    %v933 = vpop.f32.mrf.mxu0
    %934 = vdwg.mxu0
    %939 = vrot.lane.b32.xlu0 %v917, 16
    %v940 = vpop.permute.xlu0 %939
    %941 = vrot.lane.b32.xlu0 %v922, 16
    %v942 = vpop.permute.xlu0 %941
    %943 = vrot.lane.b32.xlu0 %v927, 16
    %v944 = vpop.permute.xlu0 %943
    %945 = vrot.lane.b32.xlu0 %v932, 16
    %v946 = vpop.permute.xlu0 %945
    %v951 = vsel %vm171, %v816, %v940
    %v952 = vsel %vm171, %v821, %v942
    %v953 = vsel %vm171, %v826, %v944
    %v954 = vsel %vm171, %v831, %v946
    %v955 = vld [vmem:[%s8] sm:$0x1]
    %v957 = vlaneseq
    %v958 = vshrl.u32 %v957, 7
    %v959 = vsub.s32 0, %v958
    %v960 = vrot.slane %v955, %v959
    %v962 = vadd.f32 %v951, %v960
    %v963 = vadd.f32 %v952, %v960
    %v964 = vadd.f32 %v953, %v960
    %v965 = vadd.f32 %v954, %v960
    %v966 = vld [vmem:[%s9] sm:$0x1]
    %v967 = vld [vmem:[%s10] sm:$0x1]
    %v968 = vsel %vm71, %v962, 0.0
    %v969 = vsel %vm71, %v963, 0.0
    %v970 = vadd.f32 %v968, %v969
    %v971 = vsel %vm71, %v964, 0.0
    %v972 = vadd.f32 %v970, %v971
    %v973 = vsel %vm71, %v965, 0.0
    %v974 = vadd.f32 %v972, %v973
    %v975 = vrot.slane %v974, 4
    %v976 = vadd.f32 %v974, %v975
    %v977 = vrot.slane %v976, 2
    %v978 = vadd.f32 %v976, %v977
    %v979 = vrot.slane %v978, 1
    %v980 = vadd.f32 %v978, %v979
    %v981 = vrcp.pop 32.0
    %v982 = vmul.f32 %v980, %v981
    %v983 = vsub.f32 %v962, %v982
    %v984 = vsub.f32 %v963, %v982
    %v985 = vsub.f32 %v964, %v982
    %v986 = vsub.f32 %v965, %v982
    %v987 = vmul.f32 %v983, %v983
    %v988 = vmul.f32 %v984, %v984
    %v989 = vmul.f32 %v985, %v985
    %v990 = vmul.f32 %v986, %v986
    %v991 = vsel %vm71, %v987, 0.0
    %v992 = vsel %vm71, %v988, 0.0
    %v993 = vadd.f32 %v991, %v992
    %v994 = vsel %vm71, %v989, 0.0
    %v995 = vadd.f32 %v993, %v994
    %v996 = vsel %vm71, %v990, 0.0
    %v997 = vadd.f32 %v995, %v996
    %v998 = vrot.slane %v997, 4
    %v999 = vadd.f32 %v997, %v998
    %v1000 = vrot.slane %v999, 2
    %v1001 = vadd.f32 %v999, %v1000
    %v1002 = vrot.slane %v1001, 1
    %v1003 = vadd.f32 %v1001, %v1002
    %v1004 = vmul.f32 %v1003, %v981
    %v1005 = vadd.f32 %v1004, 1e-05
    %v1006 = vrsqrt.pop %v1005
    %v1007 = vmul.f32 %v983, %v1006
    %v1008 = vmul.f32 %v984, %v1006
    %v1009 = vmul.f32 %v985, %v1006
    %v1010 = vmul.f32 %v986, %v1006
    %v1012 = vlaneseq
    %v1013 = vshrl.u32 %v1012, 7
    %v1014 = vsub.s32 0, %v1013
    %v1015 = vrot.slane %v966, %v1014
    %v1017 = vmul.f32 %v1007, %v1015
    %v1018 = vmul.f32 %v1008, %v1015
    %v1019 = vmul.f32 %v1009, %v1015
    %v1020 = vmul.f32 %v1010, %v1015
    %v1022 = vlaneseq
    %v1023 = vshrl.u32 %v1022, 7
    %v1024 = vsub.s32 0, %v1023
    %v1025 = vrot.slane %v967, %v1024
    %v1027 = vadd.f32 %v1017, %v1025
    %v1028 = vadd.f32 %v1018, %v1025
    %v1029 = vadd.f32 %v1019, %v1025
    %v1030 = vadd.f32 %v1020, %v1025
    %s1031 = sld [smem:[#allocation2 + $0x1]]
    %vm1032 = vcmp.gt.f32.partialorder %v1027, 0.0
    %vm1033 = vcmp.gt.f32.partialorder %v1028, 0.0
    %vm1034 = vcmp.gt.f32.partialorder %v1029, 0.0
    %vm1035 = vcmp.gt.f32.partialorder %v1030, 0.0
    %v1036 = vstv %s1031
    %v1037 = vmul.f32 %v1036, %v1027
    %v1038 = vmul.f32 %v1036, %v1028
    %v1039 = vmul.f32 %v1036, %v1029
    %v1040 = vmul.f32 %v1036, %v1030
    %v1041 = vsel %vm1032, %v1027, %v1037
    %v1042 = vsel %vm1033, %v1028, %v1038
    %v1043 = vsel %vm1034, %v1029, %v1039
    %v1044 = vsel %vm1035, %v1030, %v1040
    %v1045 = vld [vmem:[%s11] sm:$0xff]
    %v1046 = vld [vmem:[%s11 + $0x8] sm:$0xff]
    %v1048 = vsel %vm171, %v1041, 0
    %v1051 = vsel %vm171, %v1042, 0
    %v1054 = vsel %vm171, %v1043, 0
    %v1057 = vsel %vm171, %v1044, 0
    %1059 = vmatprep.subr.mxu0 0.0
    %1060 = vmatpush1.msra.mxu0 0.0
    %1061 = vmatprep.subr.mxu0 0.0
    %1062 = vmatpush1.msra.mxu0 0.0
    %1063 = vmatprep.subr.mxu0 0.0
    %1064 = vmatpush1.msra.mxu0 0.0
    %1065 = vmatprep.subr.mxu0 0.0
    %1066 = vmatpush1.msra.mxu0 0.0
    %1067 = vmatprep.subr.mxu0 0.0
    %1068 = vmatpush1.msra.mxu0 0.0
    %1069 = vmatprep.subr.mxu0 0.0
    %1070 = vmatpush1.msra.mxu0 0.0
    %1071 = vmatprep.subr.mxu0 0.0
    %1072 = vmatpush1.msra.mxu0 0.0
    %1073 = vmatprep.subr.mxu0 0.0
    %1074 = vmatpush1.msra.mxu0 0.0
    %1075 = vmatprep.subr.mxu0 0.0
    %1076 = vmatpush1.msra.mxu0 0.0
    %1077 = vmatprep.subr.mxu0 0.0
    %1078 = vmatpush1.msra.mxu0 0.0
    %1079 = vmatprep.subr.mxu0 0.0
    %1080 = vmatpush1.msra.mxu0 0.0
    %1081 = vmatprep.subr.mxu0 0.0
    %1082 = vmatpush1.msra.mxu0 0.0
    %1083 = vmatprep.subr.mxu0 0.0
    %1084 = vmatpush1.msra.mxu0 0.0
    %1085 = vmatprep.subr.mxu0 0.0
    %1086 = vmatpush1.msra.mxu0 0.0
    %1087 = vmatprep.subr.mxu0 0.0
    %1088 = vmatpush1.msra.mxu0 %v1046
    %1089 = vmatprep.subr.mxu0 0.0
    %1090 = vmatpush1.msra.mxu0 %v1045
    %1091 = vmatprep.subr.mxu0 0.0
    %1092 = vmatpush2.msra.mxu0 0.0
    %1093 = vmatprep.subr.mxu0 0.0
    %1094 = vmatpush2.msra.mxu0 0.0
    %1095 = vmatprep.subr.mxu0 0.0
    %1096 = vmatpush2.msra.mxu0 0.0
    %1097 = vmatprep.subr.mxu0 0.0
    %1098 = vmatpush2.msra.mxu0 0.0
    %1099 = vmatprep.subr.mxu0 0.0
    %1100 = vmatpush2.msra.mxu0 0.0
    %1101 = vmatprep.subr.mxu0 0.0
    %1102 = vmatpush2.msra.mxu0 0.0
    %1103 = vmatprep.subr.mxu0 0.0
    %1104 = vmatpush2.msra.mxu0 0.0
    %1105 = vmatprep.subr.mxu0 0.0
    %1106 = vmatpush2.msra.mxu0 0.0
    %1107 = vmatprep.subr.mxu0 0.0
    %1108 = vmatpush2.msra.mxu0 0.0
    %1109 = vmatprep.subr.mxu0 0.0
    %1110 = vmatpush2.msra.mxu0 0.0
    %1111 = vmatprep.subr.mxu0 0.0
    %1112 = vmatpush2.msra.mxu0 0.0
    %1113 = vmatprep.subr.mxu0 0.0
    %1114 = vmatpush2.msra.mxu0 0.0
    %1115 = vmatprep.subr.mxu0 0.0
    %1116 = vmatpush2.msra.mxu0 0.0
    %1117 = vmatprep.subr.mxu0 0.0
    %1118 = vmatpush2.msra.mxu0 0.0
    %1119 = vmatprep.subr.mxu0 0.0
    %1120 = vmatpush2.msra.mxu0 0.0
    %1121 = vmatprep.subr.mxu0 0.0
    %1122 = vmatpush2.msra.mxu0 0.0
    %1123 = vmatprep.mubr.f32.mxu0 0.0
    %1124 = vmatmul.mubr.f32.gmra.mxu0 %v1048
    %v1125 = vpop.f32.mrf.mxu0
    %v1126 = vadd.f32 0.0, %v1125
    %v1127 = vpop.f32.mrf.mxu0
    %1128 = vmatprep.mubr.f32.mxu0 0.0
    %1129 = vmatmul.mubr.f32.gmra.mxu0 %v1051
    %v1130 = vpop.f32.mrf.mxu0
    %v1131 = vadd.f32 0.0, %v1130
    %v1132 = vpop.f32.mrf.mxu0
    %1133 = vmatprep.mubr.f32.mxu0 0.0
    %1134 = vmatmul.mubr.f32.gmra.mxu0 %v1054
    %v1135 = vpop.f32.mrf.mxu0
    %v1136 = vadd.f32 0.0, %v1135
    %v1137 = vpop.f32.mrf.mxu0
    %1138 = vmatprep.mubr.f32.mxu0 0.0
    %1139 = vmatmul.mubr.f32.gmra.mxu0 %v1057
    %v1140 = vpop.f32.mrf.mxu0
    %v1141 = vadd.f32 0.0, %v1140
    %v1142 = vpop.f32.mrf.mxu0
    %1143 = vdwg.mxu0
    %1144 = vrot.lane.b32.xlu0 %v1041, 112
    %v1145 = vpop.permute.xlu0 %1144
    %1146 = vrot.lane.b32.xlu0 %v1042, 112
    %v1147 = vpop.permute.xlu0 %1146
    %1148 = vrot.lane.b32.xlu0 %v1043, 112
    %v1149 = vpop.permute.xlu0 %1148
    %1150 = vrot.lane.b32.xlu0 %v1044, 112
    %v1151 = vpop.permute.xlu0 %1150
    %v1152 = vsel %vm171, %v1145, 0
    %v1154 = vsel %vm171, %v1147, 0
    %v1156 = vsel %vm171, %v1149, 0
    %v1158 = vsel %vm171, %v1151, 0
    %1160 = vmatprep.subr.mxu0 0.0
    %1161 = vmatpush1.msra.mxu0 0.0
    %1162 = vmatprep.subr.mxu0 0.0
    %1163 = vmatpush1.msra.mxu0 0.0
    %1164 = vmatprep.subr.mxu0 0.0
    %1165 = vmatpush1.msra.mxu0 0.0
    %1166 = vmatprep.subr.mxu0 0.0
    %1167 = vmatpush1.msra.mxu0 0.0
    %1168 = vmatprep.subr.mxu0 0.0
    %1169 = vmatpush1.msra.mxu0 0.0
    %1170 = vmatprep.subr.mxu0 0.0
    %1171 = vmatpush1.msra.mxu0 0.0
    %1172 = vmatprep.subr.mxu0 0.0
    %1173 = vmatpush1.msra.mxu0 0.0
    %1174 = vmatprep.subr.mxu0 0.0
    %1175 = vmatpush1.msra.mxu0 0.0
    %1176 = vmatprep.subr.mxu0 0.0
    %1177 = vmatpush1.msra.mxu0 0.0
    %1178 = vmatprep.subr.mxu0 0.0
    %1179 = vmatpush1.msra.mxu0 0.0
    %1180 = vmatprep.subr.mxu0 0.0
    %1181 = vmatpush1.msra.mxu0 0.0
    %1182 = vmatprep.subr.mxu0 0.0
    %1183 = vmatpush1.msra.mxu0 0.0
    %1184 = vmatprep.subr.mxu0 0.0
    %1185 = vmatpush1.msra.mxu0 0.0
    %1186 = vmatprep.subr.mxu0 0.0
    %1187 = vmatpush1.msra.mxu0 0.0
    %1188 = vmatprep.subr.mxu0 0.0
    %1189 = vmatpush1.msra.mxu0 %v1046
    %1190 = vmatprep.subr.mxu0 0.0
    %1191 = vmatpush1.msra.mxu0 %v1045
    %1192 = vmatprep.subr.mxu0 0.0
    %1193 = vmatpush2.msra.mxu0 0.0
    %1194 = vmatprep.subr.mxu0 0.0
    %1195 = vmatpush2.msra.mxu0 0.0
    %1196 = vmatprep.subr.mxu0 0.0
    %1197 = vmatpush2.msra.mxu0 0.0
    %1198 = vmatprep.subr.mxu0 0.0
    %1199 = vmatpush2.msra.mxu0 0.0
    %1200 = vmatprep.subr.mxu0 0.0
    %1201 = vmatpush2.msra.mxu0 0.0
    %1202 = vmatprep.subr.mxu0 0.0
    %1203 = vmatpush2.msra.mxu0 0.0
    %1204 = vmatprep.subr.mxu0 0.0
    %1205 = vmatpush2.msra.mxu0 0.0
    %1206 = vmatprep.subr.mxu0 0.0
    %1207 = vmatpush2.msra.mxu0 0.0
    %1208 = vmatprep.subr.mxu0 0.0
    %1209 = vmatpush2.msra.mxu0 0.0
    %1210 = vmatprep.subr.mxu0 0.0
    %1211 = vmatpush2.msra.mxu0 0.0
    %1212 = vmatprep.subr.mxu0 0.0
    %1213 = vmatpush2.msra.mxu0 0.0
    %1214 = vmatprep.subr.mxu0 0.0
    %1215 = vmatpush2.msra.mxu0 0.0
    %1216 = vmatprep.subr.mxu0 0.0
    %1217 = vmatpush2.msra.mxu0 0.0
    %1218 = vmatprep.subr.mxu0 0.0
    %1219 = vmatpush2.msra.mxu0 0.0
    %1220 = vmatprep.subr.mxu0 0.0
    %1221 = vmatpush2.msra.mxu0 0.0
    %1222 = vmatprep.subr.mxu0 0.0
    %1223 = vmatpush2.msra.mxu0 0.0
    %1224 = vmatprep.mubr.f32.mxu0 0.0
    %1225 = vmatmul.mubr.f32.gmra.mxu0 %v1152
    %v1226 = vpop.f32.mrf.mxu0
    %v1227 = vadd.f32 0.0, %v1226
    %v1228 = vpop.f32.mrf.mxu0
    %1229 = vmatprep.mubr.f32.mxu0 0.0
    %1230 = vmatmul.mubr.f32.gmra.mxu0 %v1154
    %v1231 = vpop.f32.mrf.mxu0
    %v1232 = vadd.f32 0.0, %v1231
    %v1233 = vpop.f32.mrf.mxu0
    %1234 = vmatprep.mubr.f32.mxu0 0.0
    %1235 = vmatmul.mubr.f32.gmra.mxu0 %v1156
    %v1236 = vpop.f32.mrf.mxu0
    %v1237 = vadd.f32 0.0, %v1236
    %v1238 = vpop.f32.mrf.mxu0
    %1239 = vmatprep.mubr.f32.mxu0 0.0
    %1240 = vmatmul.mubr.f32.gmra.mxu0 %v1158
    %v1241 = vpop.f32.mrf.mxu0
    %v1242 = vadd.f32 0.0, %v1241
    %v1243 = vpop.f32.mrf.mxu0
    %1244 = vdwg.mxu0
    %1249 = vrot.lane.b32.xlu0 %v1227, 32
    %v1250 = vpop.permute.xlu0 %1249
    %1251 = vrot.lane.b32.xlu0 %v1232, 32
    %v1252 = vpop.permute.xlu0 %1251
    %1253 = vrot.lane.b32.xlu0 %v1237, 32
    %v1254 = vpop.permute.xlu0 %1253
    %1255 = vrot.lane.b32.xlu0 %v1242, 32
    %v1256 = vpop.permute.xlu0 %1255
    %v1261 = vsel %vm71, %v1126, %v1250
    %v1262 = vsel %vm71, %v1131, %v1252
    %v1263 = vsel %vm71, %v1136, %v1254
    %v1264 = vsel %vm71, %v1141, %v1256
    %v1265 = vld [vmem:[%s12] sm:$0x1]
    %v1267 = vlaneseq
    %v1268 = vshrl.u32 %v1267, 7
    %v1269 = vsub.s32 0, %v1268
    %v1270 = vrot.slane %v1265, %v1269
    %v1272 = vadd.f32 %v1261, %v1270
    %v1273 = vadd.f32 %v1262, %v1270
    %v1274 = vadd.f32 %v1263, %v1270
    %v1275 = vadd.f32 %v1264, %v1270
    %v1276 = vld [vmem:[%s13] sm:$0x1]
    %v1277 = vld [vmem:[%s14] sm:$0x1]
    %vm1278 = vcmask 523264
    %v1279 = vsel %vm1278, %v1272, 0.0
    %v1280 = vsel %vm1278, %v1273, 0.0
    %v1281 = vadd.f32 %v1279, %v1280
    %v1282 = vsel %vm1278, %v1274, 0.0
    %v1283 = vadd.f32 %v1281, %v1282
    %v1284 = vsel %vm1278, %v1275, 0.0
    %v1285 = vadd.f32 %v1283, %v1284
    %v1286 = vrot.slane %v1285, 4
    %v1287 = vadd.f32 %v1285, %v1286
    %v1288 = vrot.slane %v1287, 2
    %v1289 = vadd.f32 %v1287, %v1288
    %v1290 = vrot.slane %v1289, 1
    %v1291 = vadd.f32 %v1289, %v1290
    %v1292 = vmul.f32 %v1291, %v981
    %v1293 = vsub.f32 %v1272, %v1292
    %v1294 = vsub.f32 %v1273, %v1292
    %v1295 = vsub.f32 %v1274, %v1292
    %v1296 = vsub.f32 %v1275, %v1292
    %v1297 = vmul.f32 %v1293, %v1293
    %v1298 = vmul.f32 %v1294, %v1294
    %v1299 = vmul.f32 %v1295, %v1295
    %v1300 = vmul.f32 %v1296, %v1296
    %v1301 = vsel %vm1278, %v1297, 0.0
    %v1302 = vsel %vm1278, %v1298, 0.0
    %v1303 = vadd.f32 %v1301, %v1302
    %v1304 = vsel %vm1278, %v1299, 0.0
    %v1305 = vadd.f32 %v1303, %v1304
    %v1306 = vsel %vm1278, %v1300, 0.0
    %v1307 = vadd.f32 %v1305, %v1306
    %v1308 = vrot.slane %v1307, 4
    %v1309 = vadd.f32 %v1307, %v1308
    %v1310 = vrot.slane %v1309, 2
    %v1311 = vadd.f32 %v1309, %v1310
    %v1312 = vrot.slane %v1311, 1
    %v1313 = vadd.f32 %v1311, %v1312
    %v1314 = vmul.f32 %v1313, %v981
    %v1315 = vadd.f32 %v1314, 1e-05
    %v1316 = vrsqrt.pop %v1315
    %v1317 = vmul.f32 %v1293, %v1316
    %v1318 = vmul.f32 %v1294, %v1316
    %v1319 = vmul.f32 %v1295, %v1316
    %v1320 = vmul.f32 %v1296, %v1316
    %v1322 = vlaneseq
    %v1323 = vshrl.u32 %v1322, 7
    %v1324 = vsub.s32 0, %v1323
    %v1325 = vrot.slane %v1276, %v1324
    %v1327 = vmul.f32 %v1317, %v1325
    %v1328 = vmul.f32 %v1318, %v1325
    %v1329 = vmul.f32 %v1319, %v1325
    %v1330 = vmul.f32 %v1320, %v1325
    %v1332 = vlaneseq
    %v1333 = vshrl.u32 %v1332, 7
    %v1334 = vsub.s32 0, %v1333
    %v1335 = vrot.slane %v1277, %v1334
    %v1337 = vadd.f32 %v1327, %v1335
    %v1338 = vadd.f32 %v1328, %v1335
    %v1339 = vadd.f32 %v1329, %v1335
    %v1340 = vadd.f32 %v1330, %v1335
    %s1341 = sld [smem:[#allocation2 + $0x2]]
    %vm1342 = vcmp.gt.f32.partialorder %v1337, 0.0
    %vm1343 = vcmp.gt.f32.partialorder %v1338, 0.0
    %vm1344 = vcmp.gt.f32.partialorder %v1339, 0.0
    %vm1345 = vcmp.gt.f32.partialorder %v1340, 0.0
    %v1346 = vstv %s1341
    %v1347 = vmul.f32 %v1346, %v1337
    %v1348 = vmul.f32 %v1346, %v1338
    %v1349 = vmul.f32 %v1346, %v1339
    %v1350 = vmul.f32 %v1346, %v1340
    %v1351 = vsel %vm1342, %v1337, %v1347
    %v1352 = vsel %vm1343, %v1338, %v1348
    %v1353 = vsel %vm1344, %v1339, %v1349
    %v1354 = vsel %vm1345, %v1340, %v1350
    %1359 = vrot.lane.b32.xlu0 %v1351, 64
    %v1360 = vpop.permute.xlu0 %1359
    %1361 = vrot.lane.b32.xlu0 %v1352, 64
    %v1362 = vpop.permute.xlu0 %1361
    %1363 = vrot.lane.b32.xlu0 %v1353, 64
    %v1364 = vpop.permute.xlu0 %1363
    %1365 = vrot.lane.b32.xlu0 %v1354, 64
    %v1366 = vpop.permute.xlu0 %1365
    %v1371 = vsel %vm1278, %v729, %v1360
    %v1372 = vsel %vm1278, %v730, %v1362
    %v1373 = vsel %vm1278, %v731, %v1364
    %v1374 = vsel %vm1278, %v732, %v1366
    %1375 = vst [vmem:[%s15] sm:$0xff] %v1371
    %1376 = vst [vmem:[%s15 + $0x8] sm:$0xff] %v1372
    %1377 = vst [vmem:[%s15 + $0x10] sm:$0xff] %v1373
    %1378 = vst [vmem:[%s15 + $0x18] sm:$0xff] %v1374
    // Predicated region
    $region66: #{bgrl_forward.1} parent=1 // pred_check
      _
    $region67: #{bgrl_forward.1} parent=1 // pred_check_branch
      %1380 = sbr.rel (0) target = $region69
    $region68: #{bgrl_forward.1} parent=1 // pred_region
      _
    $region69: #{bgrl_forward.1} parent=1 // pred_fallthru
      _
    // Predicated region
    $region70: #{bgrl_forward.1} parent=1 // pred_check
      _
    $region71: #{bgrl_forward.1} parent=1 // pred_check_branch
      %1382 = sbr.rel (0) target = $region73
    $region72: #{bgrl_forward.1} parent=1 // pred_region
      _
    $region73: #{bgrl_forward.1} parent=1 // pred_fallthru
      _
    %1383 = vsyncpa [#allocation3], 1

</llo_original>
